<compile_context>
chip_gen: v6e
topology: v6e:2x2x1
jax: 0.10.0
libtpu: 0.0.40
codegen_flags: <defaults>
</compile_context>

<pallas_src>
import math

import numpy as np
import jax
import jax.numpy as jnp
from jax import lax
from jax.experimental import pallas as pl
from jax.experimental.pallas import tpu as pltpu

_HALF_LOG_2PI = 0.5 * math.log(2.0 * math.pi)


# ----------------------------------------------------------------------------
# Fused kernel: 3x Linear_BBB.get_w() + ProLoNet tree forward in one call
# ----------------------------------------------------------------------------
def _make_fused_kernel(num_nodes: int, is_value: bool, prior_std: float):
    inv_two_var = 1.0 / (2.0 * prior_std * prior_std)
    lp_c = -(math.log(prior_std) + _HALF_LOG_2PI)  # per-element prior constant
    lq_c = -_HALF_LOG_2PI                          # per-element posterior constant

    def kernel(alpha_ref, x_ref,
               lmu_ref, lrho_ref, leps_ref,
               cmu_ref, crho_ref, ceps_ref,
               amu_ref, arho_ref, aeps_ref,
               sel_ref, left_ref, right_ref, lfil_ref, rfil_ref,
               out_ref, scal_ref):
        # ---- Linear_BBB.get_w() for the three layers, entirely in VMEM ------
        def sample(mu_ref, rho_ref, eps_ref):
            mu = mu_ref[...]
            rho = rho_ref[...]
            eps = eps_ref[...]
            # Numerically stable softplus: log(1 + exp(rho)) without overflow.
            sigma = jnp.maximum(rho, 0.0) + jnp.log1p(jnp.exp(-jnp.abs(rho)))
            w = mu + sigma * eps
            n = float(mu.shape[0] * mu.shape[1])  # static element count
            # log_prior: -sum(w^2)/(2*prior^2) + n*(-log(prior)-0.5*log(2pi))
            lp = -jnp.sum(w * w, keepdims=True) * inv_two_var + n * lp_c
            # log_post, using (w - mu)/sigma == eps exactly:
            #   -0.5*sum(eps^2) - sum(log(sigma)) + n*(-0.5*log(2pi))
            lq = (-0.5 * jnp.sum(eps * eps, keepdims=True)
                  - jnp.sum(jnp.log(sigma), keepdims=True) + n * lq_c)
            return w, lp, lq

        wl, lp1, lq1 = sample(lmu_ref, lrho_ref, leps_ref)   # (K, D)
        wc, lp2, lq2 = sample(cmu_ref, crho_ref, ceps_ref)   # (K, D)
        wa, lp3, lq3 = sample(amu_ref, arho_ref, aeps_ref)   # (O, L)
        lp_total = lp1 + lp2 + lp3                            # (1, 1)
        lq_total = lq1 + lq2 + lq3                            # (1, 1)

        # ---- tree forward ----------------------------------------------------
        a = alpha_ref[0]                      # SMEM scalar
        x = x_ref[...]                        # (B, D)
        sel = sel_ref[...]                    # (K, D) normalized selector

        # comp[b,k,j] = alpha * (Wl[k,j]*x[b,j] - Wc[k,j]); sigmoid; select; sum_j
        comp = a * (wl[None, :, :] * x[:, None, :] - wc[None, :, :])
        sig3 = 1.0 / (1.0 + jnp.exp(-comp))
        sig_vals = jnp.sum(sig3 * sel[None, :, :], axis=2)    # (B, K)
        one_minus = 1.0 - sig_vals

        left = left_ref[...]                  # (K, L) 0/1 path masks
        right = right_ref[...]
        lfil = lfil_ref[...]                  # precomputed (left == 0) fillers
        rfil = rfil_ref[...]

        lf3 = left[None, :, :] * sig_vals[:, :, None] + lfil[None, :, :]
        rf3 = right[None, :, :] * one_minus[:, :, None] + rfil[None, :, :]
        fac = lf3 * rf3                       # (B, K, L)

        # Balanced (log-depth) multiply tree over the node axis: exposes ILP
        # instead of a ~2K-deep dependent multiply chain.
        terms = [fac[:, kk, :] for kk in range(num_nodes)]
        while len(terms) > 1:
            nxt = [terms[i] * terms[i + 1] for i in range(0, len(terms) - 1, 2)]
            if len(terms) % 2 == 1:
                nxt.append(terms[-1])
            terms = nxt
        probs = terms[0]                      # (B, L)

        actions = lax.dot_general(
            probs, wa, dimension_numbers=(((1,), (1,)), ((), ())),
            preferred_element_type=jnp.float32)                # (B, O)

        if is_value:
            out = actions
        else:
            # LogSoftmax(dim=1)
            m = jnp.max(actions, axis=1, keepdims=True)
            z = actions - m
            out = z - jnp.log(jnp.sum(jnp.exp(z), axis=1, keepdims=True))
        out_ref[...] = out.astype(out_ref.dtype)

        # Pack log_prior / log_post into one lane-dense row: col0=lp, col1=lq.
        col = lax.broadcasted_iota(jnp.int32, scal_ref.shape, 1)
        scal_ref[...] = jnp.where(col == 0, lp_total,
                                  jnp.where(col == 1, lq_total, 0.0))

    return kernel


# ----------------------------------------------------------------------------
# Per-model constant preparation (done once, outside the per-step forward)
# ----------------------------------------------------------------------------
def prepare_tree_constants(selector, left, right):
    # Replicates: subber[arange, argmax(dim=1)] = 0; divver[divver==0] = 1;
    #             s_temp = (selector - subber) / divver
    hot = jax.nn.one_hot(jnp.argmax(selector, axis=1), selector.shape[1],
                         dtype=selector.dtype)
    subber = selector * (1.0 - hot)
    divver = jnp.where(selector == 0.0, 1.0, selector)
    s_temp = (selector - subber) / divver
    lfil = jnp.where(left == 0.0, 1.0, 0.0)
    rfil = jnp.where(right == 0.0, 1.0, 0.0)
    return {"s_temp": s_temp, "left": left, "right": right,
            "lfil": lfil, "rfil": rfil}


# ----------------------------------------------------------------------------
# Module-level forward (single fused pallas_call)
# ----------------------------------------------------------------------------
def gaussian_prolonet_forward(x, params, consts, prior_var=1.0, is_value=False):
    """Full Gaussian_ProLoNet forward. Returns (output, log_prior, log_post)."""
    # TODO(synk): optional bayesian_embedding concat not implemented
    # (bayesian_embedding_dim=None in this configuration).
    # TODO(synk): eps could be generated on-chip with pltpu.prng_* to drop the
    # three eps input streams; kept host-side so the reference check is exact.
    b, d = x.shape
    lmu, lrho, leps = params["layers"]
    cmu, crho, ceps = params["comparators"]
    amu, arho, aeps = params["action_probs"]
    k, n_leaves = consts["left"].shape
    o = amu.shape[0]

    kernel = _make_fused_kernel(k, is_value, float(prior_var))

    def vmem_full(shape):
        nd = len(shape)
        return pl.BlockSpec(shape, lambda i, nd=nd: (0,) * nd)

    out, scal = pl.pallas_call(
        kernel,
        out_shape=(
            jax.ShapeDtypeStruct((b, o), jnp.float32),
            jax.ShapeDtypeStruct((1, 128), jnp.float32),
        ),
        grid=(1,),
        in_specs=[
            pl.BlockSpec(memory_space=pltpu.SMEM),   # alpha scalar in SMEM
            vmem_full((b, d)),
            vmem_full(lmu.shape), vmem_full(lrho.shape), vmem_full(leps.shape),
            vmem_full(cmu.shape), vmem_full(crho.shape), vmem_full(ceps.shape),
            vmem_full(amu.shape), vmem_full(arho.shape), vmem_full(aeps.shape),
            vmem_full(consts["s_temp"].shape),
            vmem_full(consts["left"].shape), vmem_full(consts["right"].shape),
            vmem_full(consts["lfil"].shape), vmem_full(consts["rfil"].shape),
        ],
        out_specs=(vmem_full((b, o)), vmem_full((1, 128))),
        compiler_params=pltpu.CompilerParams(dimension_semantics=("arbitrary",)),
    )(params["alpha"], x,
      lmu, lrho, leps, cmu, crho, ceps, amu, arho, aeps,
      consts["s_temp"], consts["left"], consts["right"],
      consts["lfil"], consts["rfil"])

    return out, scal[0, 0], scal[0, 1]


# ----------------------------------------------------------------------------
# Pure-JAX reference (mirrors the PyTorch math exactly)
# ----------------------------------------------------------------------------
def _selector_one_hot(selector):
    hot = jax.nn.one_hot(jnp.argmax(selector, axis=1), selector.shape[1],
                         dtype=selector.dtype)
    subber = selector * (1.0 - hot)
    divver = jnp.where(selector == 0.0, 1.0, selector)
    return (selector - subber) / divver


def _reference_forward(x, params, prior_var=1.0, is_value=False):
    def sample(mu, rho, eps):
        sigma = jnp.log1p(jnp.exp(rho))
        w = mu + sigma * eps
        lp = jnp.sum(-(w ** 2) / (2.0 * prior_var ** 2)
                     - jnp.log(prior_var) - _HALF_LOG_2PI)
        lq = jnp.sum(-((w - mu) ** 2) / (2.0 * sigma ** 2)
                     - jnp.log(sigma) - _HALF_LOG_2PI)
        return w, lp, lq

    w_l, lp1, lq1 = sample(*params["layers"])
    w_c, lp2, lq2 = sample(*params["comparators"])
    w_a, lp3, lq3 = sample(*params["action_probs"])
    s_temp = _selector_one_hot(params["selector"])
    alpha = params["alpha"][0]
    left, right = params["left"], params["right"]

    comp = alpha * (w_l[None, :, :] * x[:, None, :] - w_c[None, :, :])
    sig3 = 1.0 / (1.0 + jnp.exp(-comp))
    sig_vals = jnp.sum(sig3 * s_temp[None, :, :], axis=2)
    lp_mat = (left[None, :, :] * sig_vals[:, :, None]
              + jnp.where(left == 0.0, 1.0, 0.0)[None, :, :])
    rp_mat = (right[None, :, :] * (1.0 - sig_vals)[:, :, None]
              + jnp.where(right == 0.0, 1.0, 0.0)[None, :, :])
    probs = jnp.prod(lp_mat, axis=1) * jnp.prod(rp_mat, axis=1)
    actions = probs @ w_a.T
    if not is_value:
        m = jnp.max(actions, axis=1, keepdims=True)
        z = actions - m
        actions = z - jnp.log(jnp.sum(jnp.exp(z), axis=1, keepdims=True))
    return actions, lp1 + lp2 + lp3, lq1 + lq2 + lq3


def _build_paths(depth):
    """Replicates Gaussian_ProLoNet.init_paths for integer `leaves` (2**depth)."""
    n_nodes = 2 ** depth - 1
    n_leaves = 2 ** depth
    left = np.zeros((n_nodes, n_leaves), dtype=np.float32)
    for n in range(depth):
        row = 2 ** n - 1
        for i in range(n_leaves):
            col = 2 ** (depth - n) * i
            end_col = col + 2 ** (depth - 1 - n)
            if row + i >= n_nodes or end_col >= n_leaves:
                break
            left[row + i, col:end_col] = 1.0
    right = np.zeros((n_nodes, n_leaves), dtype=np.float32)
    rows, cols = np.where(left == 1)
    for r in np.unique(rows):
        c = cols[rows == r]
        start = c[-1] + 1
        right[r, start:start + len(c)] = 1.0
    return left, right


if __name__ == "__main__":
    depth = 4                       # leaves = 16 -> 15 internal nodes
    num_nodes = 2 ** depth - 1      # 15
    num_leaves = 2 ** depth         # 16
    # The reference module broadcasts its (input_dim x num_nodes) weights against
    # the input, which requires input_dim == num_nodes.
    input_dim = num_nodes           # 15
    output_dim = 4
    batch = 8
    prior_var = 1.0                 # Gaussian_ProLoNet default
    alpha = 1.0

    key = jax.random.PRNGKey(0)
    k_l, k_c, k_a, k_x = jax.random.split(key, 4)

    def init_bbb(k, out_feat, in_feat):
        k_mu, k_eps = jax.random.split(k)
        mu = jax.random.uniform(k_mu, (out_feat, in_feat), minval=-0.6,
                                maxval=0.6, dtype=jnp.float32)
        rho = jnp.full((out_feat, in_feat), -6.0, dtype=jnp.float32)
        # eps ~ N(0,1) (fresh per forward) sampled in plain JAX so the kernel
        # result can be checked against the reference deterministically.
        eps = jax.random.normal(k_eps, (out_feat, in_feat), dtype=jnp.float32)
        return mu, rho, eps

    left_np, right_np = _build_paths(depth)
    params = {
        # Linear_BBB(num_nodes, input_dim): w shape = (input_dim, num_nodes)
        "layers": init_bbb(k_l, input_dim, num_nodes),
        "comparators": init_bbb(k_c, input_dim, num_nodes),
        # Linear_BBB(num_leaves, output_dim): w shape = (output_dim, num_leaves)
        "action_probs": init_bbb(k_a, output_dim, num_leaves),
        # default selector init: ones * (1/input_dim), shaped like layers.get_w()
        "selector": jnp.full((input_dim, num_nodes), 1.0 / input_dim,
                             dtype=jnp.float32),
        "alpha": jnp.full((1,), alpha, dtype=jnp.float32),
        "left": jnp.asarray(left_np, dtype=jnp.float32),
        "right": jnp.asarray(right_np, dtype=jnp.float32),
    }
    x = jax.random.normal(k_x, (batch, input_dim), dtype=jnp.float32)

    # Per-model constants (selector one-hot, path-mask fillers) computed once.
    consts = prepare_tree_constants(params["selector"], params["left"],
                                    params["right"])

    fwd = jax.jit(lambda x_, p_, c_: gaussian_prolonet_forward(
        x_, p_, c_, prior_var=prior_var, is_value=False))

    out, log_prior, log_post = fwd(x, params, consts)
    jax.block_until_ready((out, log_prior, log_post))

    out_ref, lp_ref, lq_ref = _reference_forward(x, params, prior_var)
    assert out.shape == (batch, output_dim)
    assert jnp.allclose(out, out_ref, atol=1e-4, rtol=1e-4), "tree output mismatch"
    assert jnp.allclose(log_prior, lp_ref, atol=1e-2, rtol=1e-3), "log_prior mismatch"
    assert jnp.allclose(log_post, lq_ref, atol=1e-2, rtol=1e-3), "log_post mismatch"

    print("KERNEL_OK")
</pallas_src>

<mosaic_0001>
module attributes {stable_mosaic.version = 11 : i64} {
  func.func @kernel(%arg0: i32, %arg1: memref<1xf32, #tpu.memory_space<smem>>, %arg2: memref<8x15xf32, #tpu.memory_space<vmem>>, %arg3: memref<15x15xf32, #tpu.memory_space<vmem>>, %arg4: memref<15x15xf32, #tpu.memory_space<vmem>>, %arg5: memref<15x15xf32, #tpu.memory_space<vmem>>, %arg6: memref<15x15xf32, #tpu.memory_space<vmem>>, %arg7: memref<15x15xf32, #tpu.memory_space<vmem>>, %arg8: memref<15x15xf32, #tpu.memory_space<vmem>>, %arg9: memref<4x16xf32, #tpu.memory_space<vmem>>, %arg10: memref<4x16xf32, #tpu.memory_space<vmem>>, %arg11: memref<4x16xf32, #tpu.memory_space<vmem>>, %arg12: memref<15x15xf32, #tpu.memory_space<vmem>>, %arg13: memref<15x16xf32, #tpu.memory_space<vmem>>, %arg14: memref<15x16xf32, #tpu.memory_space<vmem>>, %arg15: memref<15x16xf32, #tpu.memory_space<vmem>>, %arg16: memref<15x16xf32, #tpu.memory_space<vmem>>, %arg17: memref<8x4xf32, #tpu.memory_space<vmem>>, %arg18: memref<1x128xf32, #tpu.memory_space<vmem>>) attributes {dimension_semantics = [#tpu.dimension_semantics<arbitrary>], iteration_bounds = array<i64: 1>, scalar_prefetch = 0 : i64, scratch_operands = 0 : i64, tpu.core_type = #tpu.core_type<tc>, window_params = [{transform_indices = @transform_0, window_bounds = array<i64: 1>}, {pipeline_mode = #tpu.pipeline_mode<synchronous>, transform_indices = @transform_1, window_bounds = array<i64: 8, 15>}, {pipeline_mode = #tpu.pipeline_mode<synchronous>, transform_indices = @transform_2, window_bounds = array<i64: 15, 15>}, {pipeline_mode = #tpu.pipeline_mode<synchronous>, transform_indices = @transform_3, window_bounds = array<i64: 15, 15>}, {pipeline_mode = #tpu.pipeline_mode<synchronous>, transform_indices = @transform_4, window_bounds = array<i64: 15, 15>}, {pipeline_mode = #tpu.pipeline_mode<synchronous>, transform_indices = @transform_5, window_bounds = array<i64: 15, 15>}, {pipeline_mode = #tpu.pipeline_mode<synchronous>, transform_indices = @transform_6, window_bounds = array<i64: 15, 15>}, {pipeline_mode = #tpu.pipeline_mode<synchronous>, transform_indices = @transform_7, window_bounds = array<i64: 15, 15>}, {pipeline_mode = #tpu.pipeline_mode<synchronous>, transform_indices = @transform_8, window_bounds = array<i64: 4, 16>}, {pipeline_mode = #tpu.pipeline_mode<synchronous>, transform_indices = @transform_9, window_bounds = array<i64: 4, 16>}, {pipeline_mode = #tpu.pipeline_mode<synchronous>, transform_indices = @transform_10, window_bounds = array<i64: 4, 16>}, {pipeline_mode = #tpu.pipeline_mode<synchronous>, transform_indices = @transform_11, window_bounds = array<i64: 15, 15>}, {pipeline_mode = #tpu.pipeline_mode<synchronous>, transform_indices = @transform_12, window_bounds = array<i64: 15, 16>}, {pipeline_mode = #tpu.pipeline_mode<synchronous>, transform_indices = @transform_13, window_bounds = array<i64: 15, 16>}, {pipeline_mode = #tpu.pipeline_mode<synchronous>, transform_indices = @transform_14, window_bounds = array<i64: 15, 16>}, {pipeline_mode = #tpu.pipeline_mode<synchronous>, transform_indices = @transform_15, window_bounds = array<i64: 15, 16>}, {pipeline_mode = #tpu.pipeline_mode<synchronous>, transform_indices = @transform_16, window_bounds = array<i64: 8, 4>}, {pipeline_mode = #tpu.pipeline_mode<synchronous>, transform_indices = @transform_17, window_bounds = array<i64: 1, 128>}]} {
    %c0 = arith.constant 0 : index
    %c0_0 = arith.constant 0 : index
    %0 = vector.load %arg3[%c0, %c0_0] : memref<15x15xf32, #tpu.memory_space<vmem>>, vector<15x15xf32>
    %c0_1 = arith.constant 0 : index
    %c0_2 = arith.constant 0 : index
    %1 = vector.load %arg4[%c0_1, %c0_2] : memref<15x15xf32, #tpu.memory_space<vmem>>, vector<15x15xf32>
    %c0_3 = arith.constant 0 : index
    %c0_4 = arith.constant 0 : index
    %2 = vector.load %arg5[%c0_3, %c0_4] : memref<15x15xf32, #tpu.memory_space<vmem>>, vector<15x15xf32>
    %cst = arith.constant 0.000000e+00 : f32
    %3 = vector.broadcast %cst : f32 to vector<15x15xf32>
    %4 = arith.maximumf %1, %3 : vector<15x15xf32>
    %5 = math.absf %1 : vector<15x15xf32>
    %cst_5 = arith.constant 0.000000e+00 : f32
    %6 = vector.broadcast %cst_5 : f32 to vector<15x15xf32>
    %7 = arith.subf %6, %5 : vector<15x15xf32>
    %8 = math.exp %7 : vector<15x15xf32>
    %9 = math.log1p %8 : vector<15x15xf32>
    %10 = arith.addf %4, %9 : vector<15x15xf32>
    %11 = arith.mulf %10, %2 : vector<15x15xf32>
    %12 = arith.addf %0, %11 : vector<15x15xf32>
    %13 = arith.mulf %12, %12 : vector<15x15xf32>
    %14 = vector.shape_cast %13 : vector<15x15xf32> to vector<1x15x15xf32>
    %cst_6 = arith.constant dense<0.000000e+00> : vector<1xf32>
    %15 = vector.multi_reduction <add>, %14, %cst_6 [1, 2] : vector<1x15x15xf32> to vector<1xf32>
    %16 = vector.shape_cast %15 : vector<1xf32> to vector<1x1x1xf32>
    %17 = vector.extract %16[0, 0, 0] : f32 from vector<1x1x1xf32>
    %18 = vector.broadcast %17 : f32 to vector<1x1xf32>
    %cst_7 = arith.constant 0.000000e+00 : f32
    %19 = vector.broadcast %cst_7 : f32 to vector<1x1xf32>
    %20 = arith.subf %19, %18 : vector<1x1xf32>
    %cst_8 = arith.constant 5.000000e-01 : f32
    %21 = vector.broadcast %cst_8 : f32 to vector<1x1xf32>
    %22 = arith.mulf %20, %21 : vector<1x1xf32>
    %cst_9 = arith.constant -206.761169 : f32
    %23 = vector.broadcast %cst_9 : f32 to vector<1x1xf32>
    %24 = arith.addf %22, %23 : vector<1x1xf32>
    %25 = arith.mulf %2, %2 : vector<15x15xf32>
    %26 = vector.shape_cast %25 : vector<15x15xf32> to vector<1x15x15xf32>
    %cst_10 = arith.constant dense<0.000000e+00> : vector<1xf32>
    %27 = vector.multi_reduction <add>, %26, %cst_10 [1, 2] : vector<1x15x15xf32> to vector<1xf32>
    %28 = vector.shape_cast %27 : vector<1xf32> to vector<1x1x1xf32>
    %29 = vector.extract %28[0, 0, 0] : f32 from vector<1x1x1xf32>
    %30 = vector.broadcast %29 : f32 to vector<1x1xf32>
    %cst_11 = arith.constant -5.000000e-01 : f32
    %31 = vector.broadcast %cst_11 : f32 to vector<1x1xf32>
    %32 = arith.mulf %31, %30 : vector<1x1xf32>
    %33 = math.log %10 : vector<15x15xf32>
    %34 = vector.shape_cast %33 : vector<15x15xf32> to vector<1x15x15xf32>
    %cst_12 = arith.constant dense<0.000000e+00> : vector<1xf32>
    %35 = vector.multi_reduction <add>, %34, %cst_12 [1, 2] : vector<1x15x15xf32> to vector<1xf32>
    %36 = vector.shape_cast %35 : vector<1xf32> to vector<1x1x1xf32>
    %37 = vector.extract %36[0, 0, 0] : f32 from vector<1x1x1xf32>
    %38 = vector.broadcast %37 : f32 to vector<1x1xf32>
    %39 = arith.subf %32, %38 : vector<1x1xf32>
    %cst_13 = arith.constant -206.761169 : f32
    %40 = vector.broadcast %cst_13 : f32 to vector<1x1xf32>
    %41 = arith.addf %39, %40 : vector<1x1xf32>
    %c0_14 = arith.constant 0 : index
    %c0_15 = arith.constant 0 : index
    %42 = vector.load %arg6[%c0_14, %c0_15] : memref<15x15xf32, #tpu.memory_space<vmem>>, vector<15x15xf32>
    %c0_16 = arith.constant 0 : index
    %c0_17 = arith.constant 0 : index
    %43 = vector.load %arg7[%c0_16, %c0_17] : memref<15x15xf32, #tpu.memory_space<vmem>>, vector<15x15xf32>
    %c0_18 = arith.constant 0 : index
    %c0_19 = arith.constant 0 : index
    %44 = vector.load %arg8[%c0_18, %c0_19] : memref<15x15xf32, #tpu.memory_space<vmem>>, vector<15x15xf32>
    %cst_20 = arith.constant 0.000000e+00 : f32
    %45 = vector.broadcast %cst_20 : f32 to vector<15x15xf32>
    %46 = arith.maximumf %43, %45 : vector<15x15xf32>
    %47 = math.absf %43 : vector<15x15xf32>
    %cst_21 = arith.constant 0.000000e+00 : f32
    %48 = vector.broadcast %cst_21 : f32 to vector<15x15xf32>
    %49 = arith.subf %48, %47 : vector<15x15xf32>
    %50 = math.exp %49 : vector<15x15xf32>
    %51 = math.log1p %50 : vector<15x15xf32>
    %52 = arith.addf %46, %51 : vector<15x15xf32>
    %53 = arith.mulf %52, %44 : vector<15x15xf32>
    %54 = arith.addf %42, %53 : vector<15x15xf32>
    %55 = arith.mulf %54, %54 : vector<15x15xf32>
    %56 = vector.shape_cast %55 : vector<15x15xf32> to vector<1x15x15xf32>
    %cst_22 = arith.constant dense<0.000000e+00> : vector<1xf32>
    %57 = vector.multi_reduction <add>, %56, %cst_22 [1, 2] : vector<1x15x15xf32> to vector<1xf32>
    %58 = vector.shape_cast %57 : vector<1xf32> to vector<1x1x1xf32>
    %59 = vector.extract %58[0, 0, 0] : f32 from vector<1x1x1xf32>
    %60 = vector.broadcast %59 : f32 to vector<1x1xf32>
    %cst_23 = arith.constant 0.000000e+00 : f32
    %61 = vector.broadcast %cst_23 : f32 to vector<1x1xf32>
    %62 = arith.subf %61, %60 : vector<1x1xf32>
    %cst_24 = arith.constant 5.000000e-01 : f32
    %63 = vector.broadcast %cst_24 : f32 to vector<1x1xf32>
    %64 = arith.mulf %62, %63 : vector<1x1xf32>
    %cst_25 = arith.constant -206.761169 : f32
    %65 = vector.broadcast %cst_25 : f32 to vector<1x1xf32>
    %66 = arith.addf %64, %65 : vector<1x1xf32>
    %67 = arith.mulf %44, %44 : vector<15x15xf32>
    %68 = vector.shape_cast %67 : vector<15x15xf32> to vector<1x15x15xf32>
    %cst_26 = arith.constant dense<0.000000e+00> : vector<1xf32>
    %69 = vector.multi_reduction <add>, %68, %cst_26 [1, 2] : vector<1x15x15xf32> to vector<1xf32>
    %70 = vector.shape_cast %69 : vector<1xf32> to vector<1x1x1xf32>
    %71 = vector.extract %70[0, 0, 0] : f32 from vector<1x1x1xf32>
    %72 = vector.broadcast %71 : f32 to vector<1x1xf32>
    %cst_27 = arith.constant -5.000000e-01 : f32
    %73 = vector.broadcast %cst_27 : f32 to vector<1x1xf32>
    %74 = arith.mulf %73, %72 : vector<1x1xf32>
    %75 = math.log %52 : vector<15x15xf32>
    %76 = vector.shape_cast %75 : vector<15x15xf32> to vector<1x15x15xf32>
    %cst_28 = arith.constant dense<0.000000e+00> : vector<1xf32>
    %77 = vector.multi_reduction <add>, %76, %cst_28 [1, 2] : vector<1x15x15xf32> to vector<1xf32>
    %78 = vector.shape_cast %77 : vector<1xf32> to vector<1x1x1xf32>
    %79 = vector.extract %78[0, 0, 0] : f32 from vector<1x1x1xf32>
    %80 = vector.broadcast %79 : f32 to vector<1x1xf32>
    %81 = arith.subf %74, %80 : vector<1x1xf32>
    %cst_29 = arith.constant -206.761169 : f32
    %82 = vector.broadcast %cst_29 : f32 to vector<1x1xf32>
    %83 = arith.addf %81, %82 : vector<1x1xf32>
    %c0_30 = arith.constant 0 : index
    %c0_31 = arith.constant 0 : index
    %84 = vector.load %arg9[%c0_30, %c0_31] : memref<4x16xf32, #tpu.memory_space<vmem>>, vector<4x16xf32>
    %c0_32 = arith.constant 0 : index
    %c0_33 = arith.constant 0 : index
    %85 = vector.load %arg10[%c0_32, %c0_33] : memref<4x16xf32, #tpu.memory_space<vmem>>, vector<4x16xf32>
    %c0_34 = arith.constant 0 : index
    %c0_35 = arith.constant 0 : index
    %86 = vector.load %arg11[%c0_34, %c0_35] : memref<4x16xf32, #tpu.memory_space<vmem>>, vector<4x16xf32>
    %cst_36 = arith.constant 0.000000e+00 : f32
    %87 = vector.broadcast %cst_36 : f32 to vector<4x16xf32>
    %88 = arith.maximumf %85, %87 : vector<4x16xf32>
    %89 = math.absf %85 : vector<4x16xf32>
    %cst_37 = arith.constant 0.000000e+00 : f32
    %90 = vector.broadcast %cst_37 : f32 to vector<4x16xf32>
    %91 = arith.subf %90, %89 : vector<4x16xf32>
    %92 = math.exp %91 : vector<4x16xf32>
    %93 = math.log1p %92 : vector<4x16xf32>
    %94 = arith.addf %88, %93 : vector<4x16xf32>
    %95 = arith.mulf %94, %86 : vector<4x16xf32>
    %96 = arith.addf %84, %95 : vector<4x16xf32>
    %97 = arith.mulf %96, %96 : vector<4x16xf32>
    %98 = vector.shape_cast %97 : vector<4x16xf32> to vector<1x4x16xf32>
    %cst_38 = arith.constant dense<0.000000e+00> : vector<1xf32>
    %99 = vector.multi_reduction <add>, %98, %cst_38 [1, 2] : vector<1x4x16xf32> to vector<1xf32>
    %100 = vector.shape_cast %99 : vector<1xf32> to vector<1x1x1xf32>
    %101 = vector.extract %100[0, 0, 0] : f32 from vector<1x1x1xf32>
    %102 = vector.broadcast %101 : f32 to vector<1x1xf32>
    %cst_39 = arith.constant 0.000000e+00 : f32
    %103 = vector.broadcast %cst_39 : f32 to vector<1x1xf32>
    %104 = arith.subf %103, %102 : vector<1x1xf32>
    %cst_40 = arith.constant 5.000000e-01 : f32
    %105 = vector.broadcast %cst_40 : f32 to vector<1x1xf32>
    %106 = arith.mulf %104, %105 : vector<1x1xf32>
    %cst_41 = arith.constant -58.8120651 : f32
    %107 = vector.broadcast %cst_41 : f32 to vector<1x1xf32>
    %108 = arith.addf %106, %107 : vector<1x1xf32>
    %109 = arith.mulf %86, %86 : vector<4x16xf32>
    %110 = vector.shape_cast %109 : vector<4x16xf32> to vector<1x4x16xf32>
    %cst_42 = arith.constant dense<0.000000e+00> : vector<1xf32>
    %111 = vector.multi_reduction <add>, %110, %cst_42 [1, 2] : vector<1x4x16xf32> to vector<1xf32>
    %112 = vector.shape_cast %111 : vector<1xf32> to vector<1x1x1xf32>
    %113 = vector.extract %112[0, 0, 0] : f32 from vector<1x1x1xf32>
    %114 = vector.broadcast %113 : f32 to vector<1x1xf32>
    %cst_43 = arith.constant -5.000000e-01 : f32
    %115 = vector.broadcast %cst_43 : f32 to vector<1x1xf32>
    %116 = arith.mulf %115, %114 : vector<1x1xf32>
    %117 = math.log %94 : vector<4x16xf32>
    %118 = vector.shape_cast %117 : vector<4x16xf32> to vector<1x4x16xf32>
    %cst_44 = arith.constant dense<0.000000e+00> : vector<1xf32>
    %119 = vector.multi_reduction <add>, %118, %cst_44 [1, 2] : vector<1x4x16xf32> to vector<1xf32>
    %120 = vector.shape_cast %119 : vector<1xf32> to vector<1x1x1xf32>
    %121 = vector.extract %120[0, 0, 0] : f32 from vector<1x1x1xf32>
    %122 = vector.broadcast %121 : f32 to vector<1x1xf32>
    %123 = arith.subf %116, %122 : vector<1x1xf32>
    %cst_45 = arith.constant -58.8120651 : f32
    %124 = vector.broadcast %cst_45 : f32 to vector<1x1xf32>
    %125 = arith.addf %123, %124 : vector<1x1xf32>
    %126 = arith.addf %24, %66 : vector<1x1xf32>
    %127 = arith.addf %126, %108 : vector<1x1xf32>
    %128 = arith.addf %41, %83 : vector<1x1xf32>
    %129 = arith.addf %128, %125 : vector<1x1xf32>
    %c0_46 = arith.constant 0 : index
    %130 = memref.load %arg1[%c0_46] : memref<1xf32, #tpu.memory_space<smem>>
    %c0_47 = arith.constant 0 : index
    %c0_48 = arith.constant 0 : index
    %131 = vector.load %arg2[%c0_47, %c0_48] : memref<8x15xf32, #tpu.memory_space<vmem>>, vector<8x15xf32>
    %c0_49 = arith.constant 0 : index
    %c0_50 = arith.constant 0 : index
    %132 = vector.load %arg12[%c0_49, %c0_50] : memref<15x15xf32, #tpu.memory_space<vmem>>, vector<15x15xf32>
    %133 = vector.shape_cast %12 : vector<15x15xf32> to vector<1x15x15xf32>
    %134 = vector.shape_cast %131 : vector<8x15xf32> to vector<8x1x15xf32>
    %135 = vector.broadcast %133 : vector<1x15x15xf32> to vector<8x15x15xf32>
    %136 = vector.broadcast %134 : vector<8x1x15xf32> to vector<8x15x15xf32>
    %137 = arith.mulf %135, %136 : vector<8x15x15xf32>
    %138 = vector.shape_cast %54 : vector<15x15xf32> to vector<1x15x15xf32>
    %139 = vector.broadcast %138 : vector<1x15x15xf32> to vector<8x15x15xf32>
    %140 = arith.subf %137, %139 : vector<8x15x15xf32>
    %141 = vector.broadcast %130 : f32 to vector<8x15x15xf32>
    %142 = arith.mulf %141, %140 : vector<8x15x15xf32>
    %cst_51 = arith.constant 0.000000e+00 : f32
    %143 = vector.broadcast %cst_51 : f32 to vector<8x15x15xf32>
    %144 = arith.subf %143, %142 : vector<8x15x15xf32>
    %145 = math.exp %144 : vector<8x15x15xf32>
    %cst_52 = arith.constant 1.000000e+00 : f32
    %146 = vector.broadcast %cst_52 : f32 to vector<8x15x15xf32>
    %147 = arith.addf %146, %145 : vector<8x15x15xf32>
    %cst_53 = arith.constant 1.000000e+00 : f32
    %148 = vector.broadcast %cst_53 : f32 to vector<8x15x15xf32>
    %149 = arith.divf %148, %147 : vector<8x15x15xf32>
    %150 = vector.shape_cast %132 : vector<15x15xf32> to vector<1x15x15xf32>
    %151 = vector.broadcast %150 : vector<1x15x15xf32> to vector<8x15x15xf32>
    %152 = arith.mulf %149, %151 : vector<8x15x15xf32>
    %cst_54 = arith.constant dense<0.000000e+00> : vector<8x15xf32>
    %153 = vector.multi_reduction <add>, %152, %cst_54 [2] : vector<8x15x15xf32> to vector<8x15xf32>
    %cst_55 = arith.constant 1.000000e+00 : f32
    %154 = vector.broadcast %cst_55 : f32 to vector<8x15xf32>
    %155 = arith.subf %154, %153 : vector<8x15xf32>
    %c0_56 = arith.constant 0 : index
    %c0_57 = arith.constant 0 : index
    %156 = vector.load %arg13[%c0_56, %c0_57] : memref<15x16xf32, #tpu.memory_space<vmem>>, vector<15x16xf32>
    %c0_58 = arith.constant 0 : index
    %c0_59 = arith.constant 0 : index
    %157 = vector.load %arg14[%c0_58, %c0_59] : memref<15x16xf32, #tpu.memory_space<vmem>>, vector<15x16xf32>
    %c0_60 = arith.constant 0 : index
    %c0_61 = arith.constant 0 : index
    %158 = vector.load %arg15[%c0_60, %c0_61] : memref<15x16xf32, #tpu.memory_space<vmem>>, vector<15x16xf32>
    %159 = vector.shape_cast %158 : vector<15x16xf32> to vector<15x16xf32>
    %c0_62 = arith.constant 0 : index
    %c0_63 = arith.constant 0 : index
    %160 = vector.load %arg16[%c0_62, %c0_63] : memref<15x16xf32, #tpu.memory_space<vmem>>, vector<15x16xf32>
    %161 = vector.shape_cast %160 : vector<15x16xf32> to vector<15x16xf32>
    %162 = vector.shape_cast %156 : vector<15x16xf32> to vector<1x15x16xf32>
    %163 = vector.shape_cast %153 : vector<8x15xf32> to vector<8x15x1xf32>
    %164 = vector.broadcast %162 : vector<1x15x16xf32> to vector<8x15x16xf32>
    %165 = vector.broadcast %163 : vector<8x15x1xf32> to vector<8x15x16xf32>
    %166 = arith.mulf %164, %165 : vector<8x15x16xf32>
    %167 = vector.shape_cast %159 : vector<15x16xf32> to vector<1x15x16xf32>
    %168 = vector.broadcast %167 : vector<1x15x16xf32> to vector<8x15x16xf32>
    %169 = arith.addf %166, %168 : vector<8x15x16xf32>
    %170 = vector.shape_cast %157 : vector<15x16xf32> to vector<1x15x16xf32>
    %171 = vector.shape_cast %155 : vector<8x15xf32> to vector<8x15x1xf32>
    %172 = vector.broadcast %170 : vector<1x15x16xf32> to vector<8x15x16xf32>
    %173 = vector.broadcast %171 : vector<8x15x1xf32> to vector<8x15x16xf32>
    %174 = arith.mulf %172, %173 : vector<8x15x16xf32>
    %175 = vector.shape_cast %161 : vector<15x16xf32> to vector<1x15x16xf32>
    %176 = vector.broadcast %175 : vector<1x15x16xf32> to vector<8x15x16xf32>
    %177 = arith.addf %174, %176 : vector<8x15x16xf32>
    %178 = arith.mulf %169, %177 : vector<8x15x16xf32>
    %179 = vector.extract_strided_slice %178 {offsets = [0, 0, 0], sizes = [8, 1, 16], strides = [1, 1, 1]} : vector<8x15x16xf32> to vector<8x1x16xf32>
    %180 = vector.shape_cast %179 : vector<8x1x16xf32> to vector<8x16xf32>
    %181 = vector.extract_strided_slice %178 {offsets = [0, 1, 0], sizes = [8, 1, 16], strides = [1, 1, 1]} : vector<8x15x16xf32> to vector<8x1x16xf32>
    %182 = vector.shape_cast %181 : vector<8x1x16xf32> to vector<8x16xf32>
    %183 = vector.extract_strided_slice %178 {offsets = [0, 2, 0], sizes = [8, 1, 16], strides = [1, 1, 1]} : vector<8x15x16xf32> to vector<8x1x16xf32>
    %184 = vector.shape_cast %183 : vector<8x1x16xf32> to vector<8x16xf32>
    %185 = vector.extract_strided_slice %178 {offsets = [0, 3, 0], sizes = [8, 1, 16], strides = [1, 1, 1]} : vector<8x15x16xf32> to vector<8x1x16xf32>
    %186 = vector.shape_cast %185 : vector<8x1x16xf32> to vector<8x16xf32>
    %187 = vector.extract_strided_slice %178 {offsets = [0, 4, 0], sizes = [8, 1, 16], strides = [1, 1, 1]} : vector<8x15x16xf32> to vector<8x1x16xf32>
    %188 = vector.shape_cast %187 : vector<8x1x16xf32> to vector<8x16xf32>
    %189 = vector.extract_strided_slice %178 {offsets = [0, 5, 0], sizes = [8, 1, 16], strides = [1, 1, 1]} : vector<8x15x16xf32> to vector<8x1x16xf32>
    %190 = vector.shape_cast %189 : vector<8x1x16xf32> to vector<8x16xf32>
    %191 = vector.extract_strided_slice %178 {offsets = [0, 6, 0], sizes = [8, 1, 16], strides = [1, 1, 1]} : vector<8x15x16xf32> to vector<8x1x16xf32>
    %192 = vector.shape_cast %191 : vector<8x1x16xf32> to vector<8x16xf32>
    %193 = vector.extract_strided_slice %178 {offsets = [0, 7, 0], sizes = [8, 1, 16], strides = [1, 1, 1]} : vector<8x15x16xf32> to vector<8x1x16xf32>
    %194 = vector.shape_cast %193 : vector<8x1x16xf32> to vector<8x16xf32>
    %195 = vector.extract_strided_slice %178 {offsets = [0, 8, 0], sizes = [8, 1, 16], strides = [1, 1, 1]} : vector<8x15x16xf32> to vector<8x1x16xf32>
    %196 = vector.shape_cast %195 : vector<8x1x16xf32> to vector<8x16xf32>
    %197 = vector.extract_strided_slice %178 {offsets = [0, 9, 0], sizes = [8, 1, 16], strides = [1, 1, 1]} : vector<8x15x16xf32> to vector<8x1x16xf32>
    %198 = vector.shape_cast %197 : vector<8x1x16xf32> to vector<8x16xf32>
    %199 = vector.extract_strided_slice %178 {offsets = [0, 10, 0], sizes = [8, 1, 16], strides = [1, 1, 1]} : vector<8x15x16xf32> to vector<8x1x16xf32>
    %200 = vector.shape_cast %199 : vector<8x1x16xf32> to vector<8x16xf32>
    %201 = vector.extract_strided_slice %178 {offsets = [0, 11, 0], sizes = [8, 1, 16], strides = [1, 1, 1]} : vector<8x15x16xf32> to vector<8x1x16xf32>
    %202 = vector.shape_cast %201 : vector<8x1x16xf32> to vector<8x16xf32>
    %203 = vector.extract_strided_slice %178 {offsets = [0, 12, 0], sizes = [8, 1, 16], strides = [1, 1, 1]} : vector<8x15x16xf32> to vector<8x1x16xf32>
    %204 = vector.shape_cast %203 : vector<8x1x16xf32> to vector<8x16xf32>
    %205 = vector.extract_strided_slice %178 {offsets = [0, 13, 0], sizes = [8, 1, 16], strides = [1, 1, 1]} : vector<8x15x16xf32> to vector<8x1x16xf32>
    %206 = vector.shape_cast %205 : vector<8x1x16xf32> to vector<8x16xf32>
    %207 = vector.extract_strided_slice %178 {offsets = [0, 14, 0], sizes = [8, 1, 16], strides = [1, 1, 1]} : vector<8x15x16xf32> to vector<8x1x16xf32>
    %208 = vector.shape_cast %207 : vector<8x1x16xf32> to vector<8x16xf32>
    %209 = arith.mulf %180, %182 : vector<8x16xf32>
    %210 = arith.mulf %184, %186 : vector<8x16xf32>
    %211 = arith.mulf %188, %190 : vector<8x16xf32>
    %212 = arith.mulf %192, %194 : vector<8x16xf32>
    %213 = arith.mulf %196, %198 : vector<8x16xf32>
    %214 = arith.mulf %200, %202 : vector<8x16xf32>
    %215 = arith.mulf %204, %206 : vector<8x16xf32>
    %216 = arith.mulf %209, %210 : vector<8x16xf32>
    %217 = arith.mulf %211, %212 : vector<8x16xf32>
    %218 = arith.mulf %213, %214 : vector<8x16xf32>
    %219 = arith.mulf %215, %208 : vector<8x16xf32>
    %220 = arith.mulf %216, %217 : vector<8x16xf32>
    %221 = arith.mulf %218, %219 : vector<8x16xf32>
    %222 = arith.mulf %220, %221 : vector<8x16xf32>
    %cst_64 = arith.constant dense<0.000000e+00> : vector<8x4xf32>
    %223 = tpu.matmul %222, %96, %cst_64 {dimension_numbers = #tpu.dot_dimension_numbers<[1], [1], [0], [0], [0, 0, 1, 0], [], []>} : vector<8x16xf32>, vector<4x16xf32>, vector<8x4xf32> -> vector<8x4xf32>
    %cst_65 = arith.constant dense<0xFF800000> : vector<8xf32>
    %224 = vector.multi_reduction <maximumf>, %223, %cst_65 [1] : vector<8x4xf32> to vector<8xf32>
    %225 = vector.shape_cast %224 : vector<8xf32> to vector<8x1xf32>
    %226 = vector.broadcast %225 : vector<8x1xf32> to vector<8x4xf32>
    %227 = arith.subf %223, %226 : vector<8x4xf32>
    %228 = math.exp %227 : vector<8x4xf32>
    %cst_66 = arith.constant dense<0.000000e+00> : vector<8xf32>
    %229 = vector.multi_reduction <add>, %228, %cst_66 [1] : vector<8x4xf32> to vector<8xf32>
    %230 = vector.shape_cast %229 : vector<8xf32> to vector<8x1xf32>
    %231 = math.log %230 : vector<8x1xf32>
    %232 = vector.broadcast %231 : vector<8x1xf32> to vector<8x4xf32>
    %233 = arith.subf %227, %232 : vector<8x4xf32>
    %c0_67 = arith.constant 0 : index
    %c0_68 = arith.constant 0 : index
    %234 = vector.load %arg17[%c0_67, %c0_68] : memref<8x4xf32, #tpu.memory_space<vmem>>, vector<8x4xf32>
    tpu.vector_store %arg17[%c0_67, %c0_68], %233 {strides = array<i32>} : memref<8x4xf32, #tpu.memory_space<vmem>>, vector<8x4xf32>,
    %235 = tpu.iota {dimensions = array<i32: 1>} : vector<1x128xi32>
    %c0_i32 = arith.constant 0 : i32
    %236 = vector.broadcast %c0_i32 : i32 to vector<1x128xi32>
    %237 = arith.cmpi eq, %235, %236 : vector<1x128xi32>
    %c1_i32 = arith.constant 1 : i32
    %238 = vector.broadcast %c1_i32 : i32 to vector<1x128xi32>
    %239 = arith.cmpi eq, %235, %238 : vector<1x128xi32>
    %cst_69 = arith.constant 0.000000e+00 : f32
    %240 = vector.shape_cast %129 : vector<1x1xf32> to vector<1x1xf32>
    %241 = vector.broadcast %240 : vector<1x1xf32> to vector<1x128xf32>
    %242 = vector.broadcast %cst_69 : f32 to vector<1x128xf32>
    %243 = arith.select %239, %241, %242 : vector<1x128xi1>, vector<1x128xf32>
    %244 = vector.shape_cast %127 : vector<1x1xf32> to vector<1x1xf32>
    %245 = vector.broadcast %244 : vector<1x1xf32> to vector<1x128xf32>
    %246 = arith.select %237, %245, %243 : vector<1x128xi1>, vector<1x128xf32>
    %c0_70 = arith.constant 0 : index
    %c0_71 = arith.constant 0 : index
    %247 = vector.load %arg18[%c0_70, %c0_71] : memref<1x128xf32, #tpu.memory_space<vmem>>, vector<1x128xf32>
    tpu.vector_store %arg18[%c0_70, %c0_71], %246 {strides = array<i32>} : memref<1x128xf32, #tpu.memory_space<vmem>>, vector<1x128xf32>,
    return
  }
  func.func @transform_0(%arg0: i32) -> i32 {
    %c0_i32 = arith.constant 0 : i32
    %c0_i32_0 = arith.constant 0 : i32
    return %c0_i32 : i32
  }
  func.func @transform_1(%arg0: i32) -> (i32, i32) {
    %c0_i32 = arith.constant 0 : i32
    %c0_i32_0 = arith.constant 0 : i32
    %c0_i32_1 = arith.constant 0 : i32
    return %c0_i32, %c0_i32_0 : i32, i32
  }
  func.func @transform_2(%arg0: i32) -> (i32, i32) {
    %c0_i32 = arith.constant 0 : i32
    %c0_i32_0 = arith.constant 0 : i32
    %c0_i32_1 = arith.constant 0 : i32
    return %c0_i32, %c0_i32_0 : i32, i32
  }
  func.func @transform_3(%arg0: i32) -> (i32, i32) {
    %c0_i32 = arith.constant 0 : i32
    %c0_i32_0 = arith.constant 0 : i32
    %c0_i32_1 = arith.constant 0 : i32
    return %c0_i32, %c0_i32_0 : i32, i32
  }
  func.func @transform_4(%arg0: i32) -> (i32, i32) {
    %c0_i32 = arith.constant 0 : i32
    %c0_i32_0 = arith.constant 0 : i32
    %c0_i32_1 = arith.constant 0 : i32
    return %c0_i32, %c0_i32_0 : i32, i32
  }
  func.func @transform_5(%arg0: i32) -> (i32, i32) {
    %c0_i32 = arith.constant 0 : i32
    %c0_i32_0 = arith.constant 0 : i32
    %c0_i32_1 = arith.constant 0 : i32
    return %c0_i32, %c0_i32_0 : i32, i32
  }
  func.func @transform_6(%arg0: i32) -> (i32, i32) {
    %c0_i32 = arith.constant 0 : i32
    %c0_i32_0 = arith.constant 0 : i32
    %c0_i32_1 = arith.constant 0 : i32
    return %c0_i32, %c0_i32_0 : i32, i32
  }
  func.func @transform_7(%arg0: i32) -> (i32, i32) {
    %c0_i32 = arith.constant 0 : i32
    %c0_i32_0 = arith.constant 0 : i32
    %c0_i32_1 = arith.constant 0 : i32
    return %c0_i32, %c0_i32_0 : i32, i32
  }
  func.func @transform_8(%arg0: i32) -> (i32, i32) {
    %c0_i32 = arith.constant 0 : i32
    %c0_i32_0 = arith.constant 0 : i32
    %c0_i32_1 = arith.constant 0 : i32
    return %c0_i32, %c0_i32_0 : i32, i32
  }
  func.func @transform_9(%arg0: i32) -> (i32, i32) {
    %c0_i32 = arith.constant 0 : i32
    %c0_i32_0 = arith.constant 0 : i32
    %c0_i32_1 = arith.constant 0 : i32
    return %c0_i32, %c0_i32_0 : i32, i32
  }
  func.func @transform_10(%arg0: i32) -> (i32, i32) {
    %c0_i32 = arith.constant 0 : i32
    %c0_i32_0 = arith.constant 0 : i32
    %c0_i32_1 = arith.constant 0 : i32
    return %c0_i32, %c0_i32_0 : i32, i32
  }
  func.func @transform_11(%arg0: i32) -> (i32, i32) {
    %c0_i32 = arith.constant 0 : i32
    %c0_i32_0 = arith.constant 0 : i32
    %c0_i32_1 = arith.constant 0 : i32
    return %c0_i32, %c0_i32_0 : i32, i32
  }
  func.func @transform_12(%arg0: i32) -> (i32, i32) {
    %c0_i32 = arith.constant 0 : i32
    %c0_i32_0 = arith.constant 0 : i32
    %c0_i32_1 = arith.constant 0 : i32
    return %c0_i32, %c0_i32_0 : i32, i32
  }
  func.func @transform_13(%arg0: i32) -> (i32, i32) {
    %c0_i32 = arith.constant 0 : i32
    %c0_i32_0 = arith.constant 0 : i32
    %c0_i32_1 = arith.constant 0 : i32
    return %c0_i32, %c0_i32_0 : i32, i32
  }
  func.func @transform_14(%arg0: i32) -> (i32, i32) {
    %c0_i32 = arith.constant 0 : i32
    %c0_i32_0 = arith.constant 0 : i32
    %c0_i32_1 = arith.constant 0 : i32
    return %c0_i32, %c0_i32_0 : i32, i32
  }
  func.func @transform_15(%arg0: i32) -> (i32, i32) {
    %c0_i32 = arith.constant 0 : i32
    %c0_i32_0 = arith.constant 0 : i32
    %c0_i32_1 = arith.constant 0 : i32
    return %c0_i32, %c0_i32_0 : i32, i32
  }
  func.func @transform_16(%arg0: i32) -> (i32, i32) {
    %c0_i32 = arith.constant 0 : i32
    %c0_i32_0 = arith.constant 0 : i32
    %c0_i32_1 = arith.constant 0 : i32
    return %c0_i32, %c0_i32_0 : i32, i32
  }
  func.func @transform_17(%arg0: i32) -> (i32, i32) {
    %c0_i32 = arith.constant 0 : i32
    %c0_i32_0 = arith.constant 0 : i32
    %c0_i32_1 = arith.constant 0 : i32
    return %c0_i32, %c0_i32_0 : i32, i32
  }
}

</mosaic_0001>

<llo_original>
// kernel: _lambda_.1
$region0: #{_lambda_.1}
  #allocation0 [shape = 'u32[]', space=smem, size = 0x4, offset = 0x4, fixed_abs, tag = 'smem constant byte address 0x4 - core index']
  #allocation1 [shape = 'u32[144,128]{1,0:T(1,128)}', space=vmem, size = 0x12000, scoped, tag = 'internal scratch']
  #allocation2 [shape = 'f32[1]{0:T(128)S(6)}', space=smem, size = 0x200, scoped, tag = 'scoped memory for _lambda_.1']
  %s0 = inlined_call_operand.<no memory space> [shape: f32[1], index: 0, kind: input, shape index: {}]
  %s1 = inlined_call_operand.hbm [shape: f32[8,15], index: 1, kind: input, shape index: {}]
  %s2 = inlined_call_operand.hbm [shape: f32[15,15], index: 2, kind: input, shape index: {}]
  %s3 = inlined_call_operand.vmem [shape: f32[15,15], index: 3, kind: input, shape index: {}]
  %s4 = inlined_call_operand.hbm [shape: f32[15,15], index: 4, kind: input, shape index: {}]
  %s5 = inlined_call_operand.hbm [shape: f32[15,15], index: 5, kind: input, shape index: {}]
  %s6 = inlined_call_operand.hbm [shape: f32[15,15], index: 6, kind: input, shape index: {}]
  %s7 = inlined_call_operand.hbm [shape: f32[15,15], index: 7, kind: input, shape index: {}]
  %s8 = inlined_call_operand.hbm [shape: f32[4,16], index: 8, kind: input, shape index: {}]
  %s9 = inlined_call_operand.hbm [shape: f32[4,16], index: 9, kind: input, shape index: {}]
  %s10 = inlined_call_operand.hbm [shape: f32[4,16], index: 10, kind: input, shape index: {}]
  %s11 = inlined_call_operand.hbm [shape: f32[15,15], index: 11, kind: input, shape index: {}]
  %s12 = inlined_call_operand.hbm [shape: f32[15,16], index: 12, kind: input, shape index: {}]
  %s13 = inlined_call_operand.hbm [shape: f32[15,16], index: 13, kind: input, shape index: {}]
  %s14 = inlined_call_operand.hbm [shape: f32[15,16], index: 14, kind: input, shape index: {}]
  %s15 = inlined_call_operand.hbm [shape: f32[15,16], index: 15, kind: input, shape index: {}]
  %s16 = inlined_call_operand.vmem [shape: f32[8,4], index: 16, kind: output, shape index: {0}]
  %s17 = inlined_call_operand.vmem [shape: f32[1,128], index: 17, kind: output, shape index: {1}]
  %18 = xla_tuple %s16, %s17
  %s19 = sld [smem:[#allocation0]]
  $region138: #{_lambda_.1} parent=0
    _
  %s21 = ssub.s32 1, %s19
  %s22 = scalar_select 0, %s21, %s19
  %23 = sst [smem:[#allocation2]] %s0
  $region1: #{_lambda_.1} parent=0
    #allocation3 [shape = 'u8[4096]{0}', space=vmem, size = 0x1000, scoped, tag = 'input window, operand 1, single buffered']
    #allocation4 [shape = 's32[1]{0}', space=sflag, size = 0x4, scoped, tag = 'scoped memory for _lambda_.1']
    #allocation5 [shape = 'u8[8192]{0}', space=vmem, size = 0x2000, scoped, tag = 'input window, operand 2, single buffered']
    #allocation6 [shape = 's32[1]{0}', space=sflag, size = 0x4, scoped, tag = 'scoped memory for _lambda_.1']
    #allocation7 [shape = 'u8[8192]{0}', space=vmem, size = 0x2000, scoped, tag = 'input window, operand 4, single buffered']
    #allocation8 [shape = 'u8[8192]{0}', space=vmem, size = 0x2000, scoped, tag = 'input window, operand 5, single buffered']
    #allocation9 [shape = 's32[1]{0}', space=sflag, size = 0x4, scoped, tag = 'scoped memory for _lambda_.1']
    #allocation10 [shape = 'u8[8192]{0}', space=vmem, size = 0x2000, scoped, tag = 'input window, operand 6, single buffered']
    #allocation11 [shape = 'u8[8192]{0}', space=vmem, size = 0x2000, scoped, tag = 'input window, operand 7, single buffered']
    #allocation12 [shape = 's32[1]{0}', space=sflag, size = 0x4, scoped, tag = 'scoped memory for _lambda_.1']
    #allocation13 [shape = 'u8[2048]{0}', space=vmem, size = 0x800, scoped, tag = 'input window, operand 8, single buffered']
    #allocation14 [shape = 'u8[2048]{0}', space=vmem, size = 0x800, scoped, tag = 'input window, operand 9, single buffered']
    #allocation15 [shape = 's32[1]{0}', space=sflag, size = 0x4, scoped, tag = 'scoped memory for _lambda_.1']
    #allocation16 [shape = 'u8[2048]{0}', space=vmem, size = 0x800, scoped, tag = 'input window, operand 10, single buffered']
    #allocation17 [shape = 'u8[8192]{0}', space=vmem, size = 0x2000, scoped, tag = 'input window, operand 11, single buffered']
    #allocation18 [shape = 's32[1]{0}', space=sflag, size = 0x4, scoped, tag = 'scoped memory for _lambda_.1']
    #allocation19 [shape = 'u8[8192]{0}', space=vmem, size = 0x2000, scoped, tag = 'input window, operand 12, single buffered']
    #allocation20 [shape = 'u8[8192]{0}', space=vmem, size = 0x2000, scoped, tag = 'input window, operand 13, single buffered']
    #allocation21 [shape = 's32[1]{0}', space=sflag, size = 0x4, scoped, tag = 'scoped memory for _lambda_.1']
    #allocation22 [shape = 'u8[8192]{0}', space=vmem, size = 0x2000, scoped, tag = 'input window, operand 14, single buffered']
    #allocation23 [shape = 'u8[8192]{0}', space=vmem, size = 0x2000, scoped, tag = 'input window, operand 15, single buffered']
    #allocation24 [shape = 's32[1]{0}', space=sflag, size = 0x4, scoped, tag = 'scoped memory for _lambda_.1']
    %24 = vsyncpa [#allocation4], 0
    %25 = vsyncpa [#allocation6], 0
    %26 = vsyncpa [#allocation9], 0
    %27 = vsyncpa [#allocation12], 0
    %28 = vsyncpa [#allocation15], 0
    %29 = vsyncpa [#allocation18], 0
    %30 = vsyncpa [#allocation21], 0
    %31 = vsyncpa [#allocation24], 0
    // Predicated region
    $region2: #{_lambda_.1} parent=1 // pred_check
      _
    $region3: #{_lambda_.1} parent=1 // pred_check_branch
      %33 = sbr.rel (0) target = $region5
    $region4: #{_lambda_.1} parent=1 // pred_region
      _
    $region5: #{_lambda_.1} parent=1 // pred_fallthru
      _
    // Predicated region
    $region6: #{_lambda_.1} parent=1 // pred_check
      _
    $region7: #{_lambda_.1} parent=1 // pred_check_branch
      %35 = sbr.rel (0) target = $region9
    $region8: #{_lambda_.1} parent=1 // pred_region
      %s37 = ssub.s32 128, 128
      %38 = vsyncadd [#allocation4], %s37
      %s40 = sshll.u32 [#allocation3], 4
      %s41 = int_to_ptr.vmem [resolvable:$true] %s40
      %43 = dma.hbm_to_vmem [thread:$0]  %s1, 128, %s41, [#allocation4]
    $region9: #{_lambda_.1} parent=1 // pred_fallthru
      _
    // Predicated region
    $region10: #{_lambda_.1} parent=1 // pred_check
      _
    $region11: #{_lambda_.1} parent=1 // pred_check_branch
      %45 = sbr.rel (0) target = $region13
    $region12: #{_lambda_.1} parent=1 // pred_region
      %s47 = ssub.s32 256, 256
      %48 = vsyncadd [#allocation6], %s47
      %s49 = sshll.u32 [#allocation5], 4
      %s50 = int_to_ptr.vmem [resolvable:$true] %s49
      %55 = dma.hbm_to_vmem [thread:$0]  %s2, 256, %s50, [#allocation6], 128, 128, 8
    $region13: #{_lambda_.1} parent=1 // pred_fallthru
      _
    // Predicated region
    $region14: #{_lambda_.1} parent=1 // pred_check
      _
    $region15: #{_lambda_.1} parent=1 // pred_check_branch
      %57 = sbr.rel (0) target = $region17
    $region16: #{_lambda_.1} parent=1 // pred_region
      _
    $region17: #{_lambda_.1} parent=1 // pred_fallthru
      _
    // Predicated region
    $region18: #{_lambda_.1} parent=1 // pred_check
      _
    $region19: #{_lambda_.1} parent=1 // pred_check_branch
      %59 = sbr.rel (0) target = $region21
    $region20: #{_lambda_.1} parent=1 // pred_region
      %s61 = ssub.s32 256, 256
      %62 = vsyncadd [#allocation6], %s61
      %s63 = sshll.u32 [#allocation7], 4
      %s64 = int_to_ptr.vmem [resolvable:$true] %s63
      %69 = dma.hbm_to_vmem [thread:$0]  %s4, 256, %s64, [#allocation6], 128, 128, 8
    $region21: #{_lambda_.1} parent=1 // pred_fallthru
      _
    // Predicated region
    $region22: #{_lambda_.1} parent=1 // pred_check
      _
    $region23: #{_lambda_.1} parent=1 // pred_check_branch
      %71 = sbr.rel (0) target = $region25
    $region24: #{_lambda_.1} parent=1 // pred_region
      %s73 = ssub.s32 256, 256
      %74 = vsyncadd [#allocation9], %s73
      %s75 = sshll.u32 [#allocation8], 4
      %s76 = int_to_ptr.vmem [resolvable:$true] %s75
      %81 = dma.hbm_to_vmem [thread:$0]  %s5, 256, %s76, [#allocation9], 128, 128, 8
    $region25: #{_lambda_.1} parent=1 // pred_fallthru
      _
    // Predicated region
    $region26: #{_lambda_.1} parent=1 // pred_check
      _
    $region27: #{_lambda_.1} parent=1 // pred_check_branch
      %83 = sbr.rel (0) target = $region29
    $region28: #{_lambda_.1} parent=1 // pred_region
      %s85 = ssub.s32 256, 256
      %86 = vsyncadd [#allocation9], %s85
      %s87 = sshll.u32 [#allocation10], 4
      %s88 = int_to_ptr.vmem [resolvable:$true] %s87
      %93 = dma.hbm_to_vmem [thread:$0]  %s6, 256, %s88, [#allocation9], 128, 128, 8
    $region29: #{_lambda_.1} parent=1 // pred_fallthru
      _
    // Predicated region
    $region30: #{_lambda_.1} parent=1 // pred_check
      _
    $region31: #{_lambda_.1} parent=1 // pred_check_branch
      %95 = sbr.rel (0) target = $region33
    $region32: #{_lambda_.1} parent=1 // pred_region
      %s97 = ssub.s32 256, 256
      %98 = vsyncadd [#allocation12], %s97
      %s99 = sshll.u32 [#allocation11], 4
      %s100 = int_to_ptr.vmem [resolvable:$true] %s99
      %105 = dma.hbm_to_vmem [thread:$0]  %s7, 256, %s100, [#allocation12], 128, 128, 8
    $region33: #{_lambda_.1} parent=1 // pred_fallthru
      _
    // Predicated region
    $region34: #{_lambda_.1} parent=1 // pred_check
      _
    $region35: #{_lambda_.1} parent=1 // pred_check_branch
      %107 = sbr.rel (0) target = $region37
    $region36: #{_lambda_.1} parent=1 // pred_region
      %s109 = ssub.s32 64, 64
      %110 = vsyncadd [#allocation12], %s109
      %s112 = sshll.u32 [#allocation13], 4
      %s113 = int_to_ptr.vmem [resolvable:$true] %s112
      %115 = dma.hbm_to_vmem [thread:$0]  %s8, 64, %s113, [#allocation12]
    $region37: #{_lambda_.1} parent=1 // pred_fallthru
      _
    // Predicated region
    $region38: #{_lambda_.1} parent=1 // pred_check
      _
    $region39: #{_lambda_.1} parent=1 // pred_check_branch
      %117 = sbr.rel (0) target = $region41
    $region40: #{_lambda_.1} parent=1 // pred_region
      %s119 = ssub.s32 64, 64
      %120 = vsyncadd [#allocation15], %s119
      %s122 = sshll.u32 [#allocation14], 4
      %s123 = int_to_ptr.vmem [resolvable:$true] %s122
      %125 = dma.hbm_to_vmem [thread:$0]  %s9, 64, %s123, [#allocation15]
    $region41: #{_lambda_.1} parent=1 // pred_fallthru
      _
    // Predicated region
    $region42: #{_lambda_.1} parent=1 // pred_check
      _
    $region43: #{_lambda_.1} parent=1 // pred_check_branch
      %127 = sbr.rel (0) target = $region45
    $region44: #{_lambda_.1} parent=1 // pred_region
      %s129 = ssub.s32 64, 64
      %130 = vsyncadd [#allocation15], %s129
      %s132 = sshll.u32 [#allocation16], 4
      %s133 = int_to_ptr.vmem [resolvable:$true] %s132
      %135 = dma.hbm_to_vmem [thread:$0]  %s10, 64, %s133, [#allocation15]
    $region45: #{_lambda_.1} parent=1 // pred_fallthru
      _
    // Predicated region
    $region46: #{_lambda_.1} parent=1 // pred_check
      _
    $region47: #{_lambda_.1} parent=1 // pred_check_branch
      %137 = sbr.rel (0) target = $region49
    $region48: #{_lambda_.1} parent=1 // pred_region
      %s139 = ssub.s32 256, 256
      %140 = vsyncadd [#allocation18], %s139
      %s141 = sshll.u32 [#allocation17], 4
      %s142 = int_to_ptr.vmem [resolvable:$true] %s141
      %147 = dma.hbm_to_vmem [thread:$0]  %s11, 256, %s142, [#allocation18], 128, 128, 8
    $region49: #{_lambda_.1} parent=1 // pred_fallthru
      _
    // Predicated region
    $region50: #{_lambda_.1} parent=1 // pred_check
      _
    $region51: #{_lambda_.1} parent=1 // pred_check_branch
      %149 = sbr.rel (0) target = $region53
    $region52: #{_lambda_.1} parent=1 // pred_region
      %s151 = ssub.s32 256, 256
      %152 = vsyncadd [#allocation18], %s151
      %s153 = sshll.u32 [#allocation19], 4
      %s154 = int_to_ptr.vmem [resolvable:$true] %s153
      %159 = dma.hbm_to_vmem [thread:$0]  %s12, 256, %s154, [#allocation18], 128, 128, 8
    $region53: #{_lambda_.1} parent=1 // pred_fallthru
      _
    // Predicated region
    $region54: #{_lambda_.1} parent=1 // pred_check
      _
    $region55: #{_lambda_.1} parent=1 // pred_check_branch
      %161 = sbr.rel (0) target = $region57
    $region56: #{_lambda_.1} parent=1 // pred_region
      %s163 = ssub.s32 256, 256
      %164 = vsyncadd [#allocation21], %s163
      %s165 = sshll.u32 [#allocation20], 4
      %s166 = int_to_ptr.vmem [resolvable:$true] %s165
      %171 = dma.hbm_to_vmem [thread:$0]  %s13, 256, %s166, [#allocation21], 128, 128, 8
    $region57: #{_lambda_.1} parent=1 // pred_fallthru
      _
    // Predicated region
    $region58: #{_lambda_.1} parent=1 // pred_check
      _
    $region59: #{_lambda_.1} parent=1 // pred_check_branch
      %173 = sbr.rel (0) target = $region61
    $region60: #{_lambda_.1} parent=1 // pred_region
      %s175 = ssub.s32 256, 256
      %176 = vsyncadd [#allocation21], %s175
      %s177 = sshll.u32 [#allocation22], 4
      %s178 = int_to_ptr.vmem [resolvable:$true] %s177
      %183 = dma.hbm_to_vmem [thread:$0]  %s14, 256, %s178, [#allocation21], 128, 128, 8
    $region61: #{_lambda_.1} parent=1 // pred_fallthru
      _
    // Predicated region
    $region62: #{_lambda_.1} parent=1 // pred_check
      _
    $region63: #{_lambda_.1} parent=1 // pred_check_branch
      %185 = sbr.rel (0) target = $region65
    $region64: #{_lambda_.1} parent=1 // pred_region
      %s187 = ssub.s32 256, 256
      %188 = vsyncadd [#allocation24], %s187
      %s189 = sshll.u32 [#allocation23], 4
      %s190 = int_to_ptr.vmem [resolvable:$true] %s189
      %195 = dma.hbm_to_vmem [thread:$0]  %s15, 256, %s190, [#allocation24], 128, 128, 8
    $region65: #{_lambda_.1} parent=1 // pred_fallthru
      _
    // Predicated region
    $region66: #{_lambda_.1} parent=1 // pred_check
      _
    $region67: #{_lambda_.1} parent=1 // pred_check_branch
      %197 = sbr.rel (0) target = $region69
    $region68: #{_lambda_.1} parent=1 // pred_region
      %198 = dma.done [#allocation4], 128
    $region69: #{_lambda_.1} parent=1 // pred_fallthru
      _
    // Predicated region
    $region70: #{_lambda_.1} parent=1 // pred_check
      _
    $region71: #{_lambda_.1} parent=1 // pred_check_branch
      %200 = sbr.rel (0) target = $region73
    $region72: #{_lambda_.1} parent=1 // pred_region
      %201 = dma.done [#allocation6], 256
    $region73: #{_lambda_.1} parent=1 // pred_fallthru
      _
    // Predicated region
    $region74: #{_lambda_.1} parent=1 // pred_check
      _
    $region75: #{_lambda_.1} parent=1 // pred_check_branch
      %203 = sbr.rel (0) target = $region77
    $region76: #{_lambda_.1} parent=1 // pred_region
      %204 = dma.done [#allocation6], 256
    $region77: #{_lambda_.1} parent=1 // pred_fallthru
      _
    // Predicated region
    $region78: #{_lambda_.1} parent=1 // pred_check
      _
    $region79: #{_lambda_.1} parent=1 // pred_check_branch
      %206 = sbr.rel (0) target = $region81
    $region80: #{_lambda_.1} parent=1 // pred_region
      %207 = dma.done [#allocation9], 256
    $region81: #{_lambda_.1} parent=1 // pred_fallthru
      _
    // Predicated region
    $region82: #{_lambda_.1} parent=1 // pred_check
      _
    $region83: #{_lambda_.1} parent=1 // pred_check_branch
      %209 = sbr.rel (0) target = $region85
    $region84: #{_lambda_.1} parent=1 // pred_region
      %210 = dma.done [#allocation9], 256
    $region85: #{_lambda_.1} parent=1 // pred_fallthru
      _
    // Predicated region
    $region86: #{_lambda_.1} parent=1 // pred_check
      _
    $region87: #{_lambda_.1} parent=1 // pred_check_branch
      %212 = sbr.rel (0) target = $region89
    $region88: #{_lambda_.1} parent=1 // pred_region
      %213 = dma.done [#allocation12], 256
    $region89: #{_lambda_.1} parent=1 // pred_fallthru
      _
    // Predicated region
    $region90: #{_lambda_.1} parent=1 // pred_check
      _
    $region91: #{_lambda_.1} parent=1 // pred_check_branch
      %215 = sbr.rel (0) target = $region93
    $region92: #{_lambda_.1} parent=1 // pred_region
      %216 = dma.done [#allocation12], 64
    $region93: #{_lambda_.1} parent=1 // pred_fallthru
      _
    // Predicated region
    $region94: #{_lambda_.1} parent=1 // pred_check
      _
    $region95: #{_lambda_.1} parent=1 // pred_check_branch
      %218 = sbr.rel (0) target = $region97
    $region96: #{_lambda_.1} parent=1 // pred_region
      %219 = dma.done [#allocation15], 64
    $region97: #{_lambda_.1} parent=1 // pred_fallthru
      _
    // Predicated region
    $region98: #{_lambda_.1} parent=1 // pred_check
      _
    $region99: #{_lambda_.1} parent=1 // pred_check_branch
      %221 = sbr.rel (0) target = $region101
    $region100: #{_lambda_.1} parent=1 // pred_region
      %222 = dma.done [#allocation15], 64
    $region101: #{_lambda_.1} parent=1 // pred_fallthru
      _
    // Predicated region
    $region102: #{_lambda_.1} parent=1 // pred_check
      _
    $region103: #{_lambda_.1} parent=1 // pred_check_branch
      %224 = sbr.rel (0) target = $region105
    $region104: #{_lambda_.1} parent=1 // pred_region
      %225 = dma.done [#allocation18], 256
    $region105: #{_lambda_.1} parent=1 // pred_fallthru
      _
    // Predicated region
    $region106: #{_lambda_.1} parent=1 // pred_check
      _
    $region107: #{_lambda_.1} parent=1 // pred_check_branch
      %227 = sbr.rel (0) target = $region109
    $region108: #{_lambda_.1} parent=1 // pred_region
      %228 = dma.done [#allocation18], 256
    $region109: #{_lambda_.1} parent=1 // pred_fallthru
      _
    // Predicated region
    $region110: #{_lambda_.1} parent=1 // pred_check
      _
    $region111: #{_lambda_.1} parent=1 // pred_check_branch
      %230 = sbr.rel (0) target = $region113
    $region112: #{_lambda_.1} parent=1 // pred_region
      %231 = dma.done [#allocation21], 256
    $region113: #{_lambda_.1} parent=1 // pred_fallthru
      _
    // Predicated region
    $region114: #{_lambda_.1} parent=1 // pred_check
      _
    $region115: #{_lambda_.1} parent=1 // pred_check_branch
      %233 = sbr.rel (0) target = $region117
    $region116: #{_lambda_.1} parent=1 // pred_region
      %234 = dma.done [#allocation21], 256
    $region117: #{_lambda_.1} parent=1 // pred_fallthru
      _
    // Predicated region
    $region118: #{_lambda_.1} parent=1 // pred_check
      _
    $region119: #{_lambda_.1} parent=1 // pred_check_branch
      %236 = sbr.rel (0) target = $region121
    $region120: #{_lambda_.1} parent=1 // pred_region
      %237 = dma.done [#allocation24], 256
    $region121: #{_lambda_.1} parent=1 // pred_fallthru
      _
    %v238 = vld [vmem:[#allocation5] sm:$0xff]
    %v239 = vld [vmem:[#allocation5 + $0x8] sm:$0x7f]
    %v240 = vld [vmem:[%s3] sm:$0xff]
    %v241 = vld [vmem:[%s3 + $0x8] sm:$0x7f]
    %v242 = vld [vmem:[#allocation7] sm:$0xff]
    %v243 = vld [vmem:[#allocation7 + $0x8] sm:$0x7f]
    %v244 = vmax.f32 %v240, 0.0
    %v245 = vmax.f32 %v241, 0.0
    %v246 = vand.u32 2147483647, %v240
    %v247 = vand.u32 2147483647, %v241
    %v248 = vsub.f32 0.0, %v246
    %v249 = vsub.f32 0.0, %v247
    %v250 = vmul.f32 %v248, 1.442695
    %v251 = vpow.pop %v250
    %v252 = vmul.f32 %v249, 1.442695
    %v253 = vpow.pop %v252
    %v254 = vadd.f32 %v251, 1.0
    %v255 = vlog2.pop %v254
    %v256 = vmul.f32 %v255, 0.6931472
    %v257 = vmul.f32 -0.5, %v251
    %v258 = vadd.f32 %v257, 1.0
    %v259 = vmul.f32 %v258, %v251
    %v260 = vand.u32 2147483647, %v251
    %vm261 = vcmp.lt.f32.partialorder %v260, 0.0004427343
    %v262 = vsel %vm261, %v259, %v256
    %v263 = vadd.f32 %v253, 1.0
    %v264 = vlog2.pop %v263
    %v265 = vmul.f32 %v264, 0.6931472
    %v266 = vmul.f32 -0.5, %v253
    %v267 = vadd.f32 %v266, 1.0
    %v268 = vmul.f32 %v267, %v253
    %v269 = vand.u32 2147483647, %v253
    %vm270 = vcmp.lt.f32.partialorder %v269, 0.0004427343
    %v271 = vsel %vm270, %v268, %v265
    %v272 = vadd.f32 %v244, %v262
    %v273 = vadd.f32 %v245, %v271
    %v274 = vmul.f32 %v272, %v242
    %v275 = vmul.f32 %v273, %v243
    %v276 = vadd.f32 %v238, %v274
    %v277 = vadd.f32 %v239, %v275
    %v278 = vmul.f32 %v276, %v276
    %v279 = vmul.f32 %v277, %v277
    %vm280 = vcmask 121856
    %v281 = vsel %vm280, %v278, 0.0
    %vm282 = vcmask 120832
    %v283 = vsel %vm282, %v279, 0.0
    %v284 = vadd.f32 %v281, %v283
    %285 = vadd.xlane.f32.xlu0 %v284
    %v286 = vpop.xlane.xlu0 %285
    %v287 = vrot.slane %v286, 4
    %v288 = vadd.f32 %v286, %v287
    %v289 = vrot.slane %v288, 2
    %v290 = vadd.f32 %v288, %v289
    %v291 = vrot.slane %v290, 1
    %v292 = vadd.f32 %v290, %v291
    %s293 = vtos %v292
    %v294 = vstv %s293
    %v295 = vsub.f32 0.0, %v294
    %v296 = vmul.f32 %v295, 0.5
    %v297 = vadd.f32 %v296, -206.76117
    %v298 = vmul.f32 %v242, %v242
    %v299 = vmul.f32 %v243, %v243
    %v300 = vsel %vm280, %v298, 0.0
    %v301 = vsel %vm282, %v299, 0.0
    %v302 = vadd.f32 %v300, %v301
    %303 = vadd.xlane.f32.xlu0 %v302
    %v304 = vpop.xlane.xlu0 %303
    %v305 = vrot.slane %v304, 4
    %v306 = vadd.f32 %v304, %v305
    %v307 = vrot.slane %v306, 2
    %v308 = vadd.f32 %v306, %v307
    %v309 = vrot.slane %v308, 1
    %v310 = vadd.f32 %v308, %v309
    %s311 = vtos %v310
    %v312 = vstv %s311
    %v313 = vmul.f32 %v312, -0.5
    %v314 = vlog2.pop %v272
    %v315 = vmul.f32 %v314, 0.6931472
    %v316 = vlog2.pop %v273
    %v317 = vmul.f32 %v316, 0.6931472
    %v318 = vsel %vm280, %v315, 0.0
    %v319 = vsel %vm282, %v317, 0.0
    %v320 = vadd.f32 %v318, %v319
    %321 = vadd.xlane.f32.xlu0 %v320
    %v322 = vpop.xlane.xlu0 %321
    %v323 = vrot.slane %v322, 4
    %v324 = vadd.f32 %v322, %v323
    %v325 = vrot.slane %v324, 2
    %v326 = vadd.f32 %v324, %v325
    %v327 = vrot.slane %v326, 1
    %v328 = vadd.f32 %v326, %v327
    %s329 = vtos %v328
    %v330 = vstv %s329
    %v331 = vsub.f32 %v313, %v330
    %v332 = vadd.f32 %v331, -206.76117
    %v333 = vld [vmem:[#allocation8] sm:$0xff]
    %v334 = vld [vmem:[#allocation8 + $0x8] sm:$0x7f]
    %v335 = vld [vmem:[#allocation10] sm:$0xff]
    %v336 = vld [vmem:[#allocation10 + $0x8] sm:$0x7f]
    %v337 = vld [vmem:[#allocation11] sm:$0xff]
    %v338 = vld [vmem:[#allocation11 + $0x8] sm:$0x7f]
    %v339 = vmax.f32 %v335, 0.0
    %v340 = vmax.f32 %v336, 0.0
    %v341 = vand.u32 2147483647, %v335
    %v342 = vand.u32 2147483647, %v336
    %v343 = vsub.f32 0.0, %v341
    %v344 = vsub.f32 0.0, %v342
    %v345 = vmul.f32 %v343, 1.442695
    %v346 = vpow.pop %v345
    %v347 = vmul.f32 %v344, 1.442695
    %v348 = vpow.pop %v347
    %v349 = vadd.f32 %v346, 1.0
    %v350 = vlog2.pop %v349
    %v351 = vmul.f32 %v350, 0.6931472
    %v352 = vmul.f32 -0.5, %v346
    %v353 = vadd.f32 %v352, 1.0
    %v354 = vmul.f32 %v353, %v346
    %v355 = vand.u32 2147483647, %v346
    %vm356 = vcmp.lt.f32.partialorder %v355, 0.0004427343
    %v357 = vsel %vm356, %v354, %v351
    %v358 = vadd.f32 %v348, 1.0
    %v359 = vlog2.pop %v358
    %v360 = vmul.f32 %v359, 0.6931472
    %v361 = vmul.f32 -0.5, %v348
    %v362 = vadd.f32 %v361, 1.0
    %v363 = vmul.f32 %v362, %v348
    %v364 = vand.u32 2147483647, %v348
    %vm365 = vcmp.lt.f32.partialorder %v364, 0.0004427343
    %v366 = vsel %vm365, %v363, %v360
    %v367 = vadd.f32 %v339, %v357
    %v368 = vadd.f32 %v340, %v366
    %v369 = vmul.f32 %v367, %v337
    %v370 = vmul.f32 %v368, %v338
    %v371 = vadd.f32 %v333, %v369
    %v372 = vadd.f32 %v334, %v370
    %v373 = vmul.f32 %v371, %v371
    %v374 = vmul.f32 %v372, %v372
    %v375 = vsel %vm280, %v373, 0.0
    %v376 = vsel %vm282, %v374, 0.0
    %v377 = vadd.f32 %v375, %v376
    %378 = vadd.xlane.f32.xlu0 %v377
    %v379 = vpop.xlane.xlu0 %378
    %v380 = vrot.slane %v379, 4
    %v381 = vadd.f32 %v379, %v380
    %v382 = vrot.slane %v381, 2
    %v383 = vadd.f32 %v381, %v382
    %v384 = vrot.slane %v383, 1
    %v385 = vadd.f32 %v383, %v384
    %s386 = vtos %v385
    %v387 = vstv %s386
    %v388 = vsub.f32 0.0, %v387
    %v389 = vmul.f32 %v388, 0.5
    %v390 = vadd.f32 %v389, -206.76117
    %v391 = vmul.f32 %v337, %v337
    %v392 = vmul.f32 %v338, %v338
    %v393 = vsel %vm280, %v391, 0.0
    %v394 = vsel %vm282, %v392, 0.0
    %v395 = vadd.f32 %v393, %v394
    %396 = vadd.xlane.f32.xlu0 %v395
    %v397 = vpop.xlane.xlu0 %396
    %v398 = vrot.slane %v397, 4
    %v399 = vadd.f32 %v397, %v398
    %v400 = vrot.slane %v399, 2
    %v401 = vadd.f32 %v399, %v400
    %v402 = vrot.slane %v401, 1
    %v403 = vadd.f32 %v401, %v402
    %s404 = vtos %v403
    %v405 = vstv %s404
    %v406 = vmul.f32 %v405, -0.5
    %v407 = vlog2.pop %v367
    %v408 = vmul.f32 %v407, 0.6931472
    %v409 = vlog2.pop %v368
    %v410 = vmul.f32 %v409, 0.6931472
    %v411 = vsel %vm280, %v408, 0.0
    %v412 = vsel %vm282, %v410, 0.0
    %v413 = vadd.f32 %v411, %v412
    %414 = vadd.xlane.f32.xlu0 %v413
    %v415 = vpop.xlane.xlu0 %414
    %v416 = vrot.slane %v415, 4
    %v417 = vadd.f32 %v415, %v416
    %v418 = vrot.slane %v417, 2
    %v419 = vadd.f32 %v417, %v418
    %v420 = vrot.slane %v419, 1
    %v421 = vadd.f32 %v419, %v420
    %s422 = vtos %v421
    %v423 = vstv %s422
    %v424 = vsub.f32 %v406, %v423
    %v425 = vadd.f32 %v424, -206.76117
    %v426 = vld [vmem:[#allocation13] sm:$0xf]
    %v427 = vld [vmem:[#allocation14] sm:$0xf]
    %v428 = vld [vmem:[#allocation16] sm:$0xf]
    %v429 = vmax.f32 %v427, 0.0
    %v430 = vand.u32 2147483647, %v427
    %v431 = vsub.f32 0.0, %v430
    %v432 = vmul.f32 %v431, 1.442695
    %v433 = vpow.pop %v432
    %v434 = vadd.f32 %v433, 1.0
    %v435 = vlog2.pop %v434
    %v436 = vmul.f32 %v435, 0.6931472
    %v437 = vmul.f32 -0.5, %v433
    %v438 = vadd.f32 %v437, 1.0
    %v439 = vmul.f32 %v438, %v433
    %v440 = vand.u32 2147483647, %v433
    %vm441 = vcmp.lt.f32.partialorder %v440, 0.0004427343
    %v442 = vsel %vm441, %v439, %v436
    %v443 = vadd.f32 %v429, %v442
    %v444 = vmul.f32 %v443, %v428
    %v445 = vadd.f32 %v426, %v444
    %v446 = vmul.f32 %v445, %v445
    %vm447 = vcmask 125952
    %v448 = vsel %vm447, %v446, 0.0
    %449 = vadd.xlane.f32.xlu0 %v448
    %v450 = vpop.xlane.xlu0 %449
    %v451 = vrot.slane %v450, 4
    %v452 = vadd.f32 %v450, %v451
    %v453 = vrot.slane %v452, 2
    %v454 = vadd.f32 %v452, %v453
    %v455 = vrot.slane %v454, 1
    %v456 = vadd.f32 %v454, %v455
    %s457 = vtos %v456
    %v458 = vstv %s457
    %v459 = vsub.f32 0.0, %v458
    %v460 = vmul.f32 %v459, 0.5
    %v461 = vadd.f32 %v460, -58.812065
    %v462 = vmul.f32 %v428, %v428
    %v463 = vsel %vm447, %v462, 0.0
    %464 = vadd.xlane.f32.xlu0 %v463
    %v465 = vpop.xlane.xlu0 %464
    %v466 = vrot.slane %v465, 4
    %v467 = vadd.f32 %v465, %v466
    %v468 = vrot.slane %v467, 2
    %v469 = vadd.f32 %v467, %v468
    %v470 = vrot.slane %v469, 1
    %v471 = vadd.f32 %v469, %v470
    %s472 = vtos %v471
    %v473 = vstv %s472
    %v474 = vmul.f32 %v473, -0.5
    %v475 = vlog2.pop %v443
    %v476 = vmul.f32 %v475, 0.6931472
    %v477 = vsel %vm447, %v476, 0.0
    %478 = vadd.xlane.f32.xlu0 %v477
    %v479 = vpop.xlane.xlu0 %478
    %v480 = vrot.slane %v479, 4
    %v481 = vadd.f32 %v479, %v480
    %v482 = vrot.slane %v481, 2
    %v483 = vadd.f32 %v481, %v482
    %v484 = vrot.slane %v483, 1
    %v485 = vadd.f32 %v483, %v484
    %s486 = vtos %v485
    %v487 = vstv %s486
    %v488 = vsub.f32 %v474, %v487
    %v489 = vadd.f32 %v488, -58.812065
    %v490 = vadd.f32 %v297, %v390
    %v491 = vadd.f32 %v490, %v461
    %v492 = vadd.f32 %v332, %v425
    %v493 = vadd.f32 %v492, %v489
    %s494 = sld [smem:[#allocation2]]
    %v495 = vld [vmem:[#allocation3] sm:$0xff]
    %v496 = vld [vmem:[#allocation17] sm:$0xff]
    %v497 = vld [vmem:[#allocation17 + $0x8] sm:$0x7f]
    %v499 = vcombine.high %v495, %v495
    %v501 = vunpack.c.l.s4 1966171168
    %v502 = vunpack.c.0.s8 %v501
    %v503 = vlaneseq
    %v504 = vshrl.u32 %v503, 7
    %v505 = vsub.s32 %v502, %v504
    %v506 = vrot.slane %v495, %v505
    %v508 = vunpack.c.l.s4 1966171168
    %v509 = vunpack.c.0.s8 %v508
    %v510 = vlaneseq
    %v511 = vshrl.u32 %v510, 7
    %v512 = vsub.s32 %v509, %v511
    %v513 = vrot.slane %v499, %v512
    %v514 = vcombine.high %v506, %v506
    %v515 = vcombine.high %v513, %v513
    %v517 = vunpack.c.l.s4 1966171168
    %v518 = vunpack.c.0.s8 %v517
    %v519 = vlaneseq
    %v520 = vshrl.u32 %v519, 7
    %v521 = vsub.s32 %v518, %v520
    %v522 = vrot.slane %v506, %v521
    %v524 = vunpack.c.l.s4 1966171168
    %v525 = vunpack.c.0.s8 %v524
    %v526 = vlaneseq
    %v527 = vshrl.u32 %v526, 7
    %v528 = vsub.s32 %v525, %v527
    %v529 = vrot.slane %v513, %v528
    %v531 = vunpack.c.l.s4 1966171168
    %v532 = vunpack.c.0.s8 %v531
    %v533 = vlaneseq
    %v534 = vshrl.u32 %v533, 7
    %v535 = vsub.s32 %v532, %v534
    %v536 = vrot.slane %v514, %v535
    %v538 = vunpack.c.l.s4 1966171168
    %v539 = vunpack.c.0.s8 %v538
    %v540 = vlaneseq
    %v541 = vshrl.u32 %v540, 7
    %v542 = vsub.s32 %v539, %v541
    %v543 = vrot.slane %v515, %v542
    %v544 = vcombine.high %v522, %v522
    %v545 = vcombine.high %v529, %v529
    %v546 = vcombine.high %v536, %v536
    %v547 = vcombine.high %v543, %v543
    %v548 = vlaneseq
    %v549 = vshrl.u32 %v548, 7
    %v550 = vsub.s32 0, %v549
    %v551 = vrot.slane %v522, %v550
    %v552 = vlaneseq
    %v553 = vshrl.u32 %v552, 7
    %v554 = vsub.s32 0, %v553
    %v555 = vrot.slane %v536, %v554
    %v556 = vlaneseq
    %v557 = vshrl.u32 %v556, 7
    %v558 = vsub.s32 0, %v557
    %v559 = vrot.slane %v544, %v558
    %v560 = vlaneseq
    %v561 = vshrl.u32 %v560, 7
    %v562 = vsub.s32 0, %v561
    %v563 = vrot.slane %v546, %v562
    %v564 = vlaneseq
    %v565 = vshrl.u32 %v564, 7
    %v566 = vsub.s32 0, %v565
    %v567 = vrot.slane %v529, %v566
    %v568 = vlaneseq
    %v569 = vshrl.u32 %v568, 7
    %v570 = vsub.s32 0, %v569
    %v571 = vrot.slane %v543, %v570
    %v572 = vlaneseq
    %v573 = vshrl.u32 %v572, 7
    %v574 = vsub.s32 0, %v573
    %v575 = vrot.slane %v545, %v574
    %v576 = vlaneseq
    %v577 = vshrl.u32 %v576, 7
    %v578 = vsub.s32 0, %v577
    %v579 = vrot.slane %v547, %v578
    %v588 = vmul.f32 %v276, %v551
    %v589 = vmul.f32 %v277, %v551
    %v590 = vmul.f32 %v276, %v555
    %v591 = vmul.f32 %v277, %v555
    %v592 = vmul.f32 %v276, %v559
    %v593 = vmul.f32 %v277, %v559
    %v594 = vmul.f32 %v276, %v563
    %v595 = vmul.f32 %v277, %v563
    %v596 = vmul.f32 %v276, %v567
    %v597 = vmul.f32 %v277, %v567
    %v598 = vmul.f32 %v276, %v571
    %v599 = vmul.f32 %v277, %v571
    %v600 = vmul.f32 %v276, %v575
    %v601 = vmul.f32 %v277, %v575
    %v602 = vmul.f32 %v276, %v579
    %v603 = vmul.f32 %v277, %v579
    %v604 = vsub.f32 %v588, %v371
    %v605 = vsub.f32 %v589, %v372
    %v606 = vsub.f32 %v590, %v371
    %v607 = vsub.f32 %v591, %v372
    %v608 = vsub.f32 %v592, %v371
    %v609 = vsub.f32 %v593, %v372
    %v610 = vsub.f32 %v594, %v371
    %v611 = vsub.f32 %v595, %v372
    %v612 = vsub.f32 %v596, %v371
    %v613 = vsub.f32 %v597, %v372
    %v614 = vsub.f32 %v598, %v371
    %v615 = vsub.f32 %v599, %v372
    %v616 = vsub.f32 %v600, %v371
    %v617 = vsub.f32 %v601, %v372
    %v618 = vsub.f32 %v602, %v371
    %v619 = vsub.f32 %v603, %v372
    %v620 = vstv %s494
    %v621 = vmul.f32 %v620, %v604
    %v622 = vmul.f32 %v620, %v605
    %v623 = vmul.f32 %v620, %v606
    %v624 = vmul.f32 %v620, %v607
    %v625 = vmul.f32 %v620, %v608
    %v626 = vmul.f32 %v620, %v609
    %v627 = vmul.f32 %v620, %v610
    %v628 = vmul.f32 %v620, %v611
    %v629 = vmul.f32 %v620, %v612
    %v630 = vmul.f32 %v620, %v613
    %v631 = vmul.f32 %v620, %v614
    %v632 = vmul.f32 %v620, %v615
    %v633 = vmul.f32 %v620, %v616
    %v634 = vmul.f32 %v620, %v617
    %v635 = vmul.f32 %v620, %v618
    %v636 = vmul.f32 %v620, %v619
    %v637 = vsub.f32 0.0, %v621
    %v638 = vsub.f32 0.0, %v622
    %v639 = vsub.f32 0.0, %v623
    %v640 = vsub.f32 0.0, %v624
    %v641 = vsub.f32 0.0, %v625
    %v642 = vsub.f32 0.0, %v626
    %v643 = vsub.f32 0.0, %v627
    %v644 = vsub.f32 0.0, %v628
    %v645 = vsub.f32 0.0, %v629
    %v646 = vsub.f32 0.0, %v630
    %v647 = vsub.f32 0.0, %v631
    %v648 = vsub.f32 0.0, %v632
    %v649 = vsub.f32 0.0, %v633
    %v650 = vsub.f32 0.0, %v634
    %v651 = vsub.f32 0.0, %v635
    %v652 = vsub.f32 0.0, %v636
    %v653 = vmul.f32 %v637, 1.442695
    %v654 = vpow.pop %v653
    %v655 = vmul.f32 %v638, 1.442695
    %v656 = vpow.pop %v655
    %v657 = vmul.f32 %v639, 1.442695
    %v658 = vpow.pop %v657
    %v659 = vmul.f32 %v640, 1.442695
    %v660 = vpow.pop %v659
    %v661 = vmul.f32 %v641, 1.442695
    %v662 = vpow.pop %v661
    %v663 = vmul.f32 %v642, 1.442695
    %v664 = vpow.pop %v663
    %v665 = vmul.f32 %v643, 1.442695
    %v666 = vpow.pop %v665
    %v667 = vmul.f32 %v644, 1.442695
    %v668 = vpow.pop %v667
    %v669 = vmul.f32 %v645, 1.442695
    %v670 = vpow.pop %v669
    %v671 = vmul.f32 %v646, 1.442695
    %v672 = vpow.pop %v671
    %v673 = vmul.f32 %v647, 1.442695
    %v674 = vpow.pop %v673
    %v675 = vmul.f32 %v648, 1.442695
    %v676 = vpow.pop %v675
    %v677 = vmul.f32 %v649, 1.442695
    %v678 = vpow.pop %v677
    %v679 = vmul.f32 %v650, 1.442695
    %v680 = vpow.pop %v679
    %v681 = vmul.f32 %v651, 1.442695
    %v682 = vpow.pop %v681
    %v683 = vmul.f32 %v652, 1.442695
    %v684 = vpow.pop %v683
    %v685 = vadd.f32 %v654, 1.0
    %v686 = vadd.f32 %v656, 1.0
    %v687 = vadd.f32 %v658, 1.0
    %v688 = vadd.f32 %v660, 1.0
    %v689 = vadd.f32 %v662, 1.0
    %v690 = vadd.f32 %v664, 1.0
    %v691 = vadd.f32 %v666, 1.0
    %v692 = vadd.f32 %v668, 1.0
    %v693 = vadd.f32 %v670, 1.0
    %v694 = vadd.f32 %v672, 1.0
    %v695 = vadd.f32 %v674, 1.0
    %v696 = vadd.f32 %v676, 1.0
    %v697 = vadd.f32 %v678, 1.0
    %v698 = vadd.f32 %v680, 1.0
    %v699 = vadd.f32 %v682, 1.0
    %v700 = vadd.f32 %v684, 1.0
    %v701 = vrcp.pop %v685
    %v702 = vmul.f32 1.0, %v701
    %v703 = vrcp.pop %v686
    %v704 = vmul.f32 1.0, %v703
    %v705 = vrcp.pop %v687
    %v706 = vmul.f32 1.0, %v705
    %v707 = vrcp.pop %v688
    %v708 = vmul.f32 1.0, %v707
    %v709 = vrcp.pop %v689
    %v710 = vmul.f32 1.0, %v709
    %v711 = vrcp.pop %v690
    %v712 = vmul.f32 1.0, %v711
    %v713 = vrcp.pop %v691
    %v714 = vmul.f32 1.0, %v713
    %v715 = vrcp.pop %v692
    %v716 = vmul.f32 1.0, %v715
    %v717 = vrcp.pop %v693
    %v718 = vmul.f32 1.0, %v717
    %v719 = vrcp.pop %v694
    %v720 = vmul.f32 1.0, %v719
    %v721 = vrcp.pop %v695
    %v722 = vmul.f32 1.0, %v721
    %v723 = vrcp.pop %v696
    %v724 = vmul.f32 1.0, %v723
    %v725 = vrcp.pop %v697
    %v726 = vmul.f32 1.0, %v725
    %v727 = vrcp.pop %v698
    %v728 = vmul.f32 1.0, %v727
    %v729 = vrcp.pop %v699
    %v730 = vmul.f32 1.0, %v729
    %v731 = vrcp.pop %v700
    %v732 = vmul.f32 1.0, %v731
    %v733 = vmul.f32 %v702, %v496
    %v734 = vmul.f32 %v704, %v497
    %v735 = vmul.f32 %v706, %v496
    %v736 = vmul.f32 %v708, %v497
    %v737 = vmul.f32 %v710, %v496
    %v738 = vmul.f32 %v712, %v497
    %v739 = vmul.f32 %v714, %v496
    %v740 = vmul.f32 %v716, %v497
    %v741 = vmul.f32 %v718, %v496
    %v742 = vmul.f32 %v720, %v497
    %v743 = vmul.f32 %v722, %v496
    %v744 = vmul.f32 %v724, %v497
    %v745 = vmul.f32 %v726, %v496
    %v746 = vmul.f32 %v728, %v497
    %v747 = vmul.f32 %v730, %v496
    %v748 = vmul.f32 %v732, %v497
    %v749 = vsel %vm280, %v733, 0.0
    %750 = vadd.xlane.f32.xlu0 %v749
    %v751 = vpop.xlane.xlu0 %750
    %v752 = vsel %vm282, %v734, 0.0
    %753 = vadd.xlane.f32.xlu0 %v752
    %v754 = vpop.xlane.xlu0 %753
    %v755 = vsel %vm280, %v735, 0.0
    %756 = vadd.xlane.f32.xlu0 %v755
    %v757 = vpop.xlane.xlu0 %756
    %v758 = vsel %vm282, %v736, 0.0
    %759 = vadd.xlane.f32.xlu0 %v758
    %v760 = vpop.xlane.xlu0 %759
    %v761 = vsel %vm280, %v737, 0.0
    %762 = vadd.xlane.f32.xlu0 %v761
    %v763 = vpop.xlane.xlu0 %762
    %v764 = vsel %vm282, %v738, 0.0
    %765 = vadd.xlane.f32.xlu0 %v764
    %v766 = vpop.xlane.xlu0 %765
    %v767 = vsel %vm280, %v739, 0.0
    %768 = vadd.xlane.f32.xlu0 %v767
    %v769 = vpop.xlane.xlu0 %768
    %v770 = vsel %vm282, %v740, 0.0
    %771 = vadd.xlane.f32.xlu0 %v770
    %v772 = vpop.xlane.xlu0 %771
    %v773 = vsel %vm280, %v741, 0.0
    %774 = vadd.xlane.f32.xlu0 %v773
    %v775 = vpop.xlane.xlu0 %774
    %v776 = vsel %vm282, %v742, 0.0
    %777 = vadd.xlane.f32.xlu0 %v776
    %v778 = vpop.xlane.xlu0 %777
    %v779 = vsel %vm280, %v743, 0.0
    %780 = vadd.xlane.f32.xlu0 %v779
    %v781 = vpop.xlane.xlu0 %780
    %v782 = vsel %vm282, %v744, 0.0
    %783 = vadd.xlane.f32.xlu0 %v782
    %v784 = vpop.xlane.xlu0 %783
    %v785 = vsel %vm280, %v745, 0.0
    %786 = vadd.xlane.f32.xlu0 %v785
    %v787 = vpop.xlane.xlu0 %786
    %v788 = vsel %vm282, %v746, 0.0
    %789 = vadd.xlane.f32.xlu0 %v788
    %v790 = vpop.xlane.xlu0 %789
    %v791 = vsel %vm280, %v747, 0.0
    %792 = vadd.xlane.f32.xlu0 %v791
    %v793 = vpop.xlane.xlu0 %792
    %v794 = vsel %vm282, %v748, 0.0
    %795 = vadd.xlane.f32.xlu0 %v794
    %v796 = vpop.xlane.xlu0 %795
    %v797 = vsub.f32 1.0, %v751
    %v798 = vsub.f32 1.0, %v754
    %v799 = vsub.f32 1.0, %v757
    %v800 = vsub.f32 1.0, %v760
    %v801 = vsub.f32 1.0, %v763
    %v802 = vsub.f32 1.0, %v766
    %v803 = vsub.f32 1.0, %v769
    %v804 = vsub.f32 1.0, %v772
    %v805 = vsub.f32 1.0, %v775
    %v806 = vsub.f32 1.0, %v778
    %v807 = vsub.f32 1.0, %v781
    %v808 = vsub.f32 1.0, %v784
    %v809 = vsub.f32 1.0, %v787
    %v810 = vsub.f32 1.0, %v790
    %v811 = vsub.f32 1.0, %v793
    %v812 = vsub.f32 1.0, %v796
    %v813 = vld [vmem:[#allocation19] sm:$0xff]
    %v814 = vld [vmem:[#allocation19 + $0x8] sm:$0x7f]
    %v815 = vld [vmem:[#allocation20] sm:$0xff]
    %v816 = vld [vmem:[#allocation20 + $0x8] sm:$0x7f]
    %v817 = vld [vmem:[#allocation22] sm:$0xff]
    %v818 = vld [vmem:[#allocation22 + $0x8] sm:$0x7f]
    %v819 = vld [vmem:[#allocation23] sm:$0xff]
    %v820 = vld [vmem:[#allocation23 + $0x8] sm:$0x7f]
    %v821 = vmul.f32 %v813, %v751
    %v822 = vmul.f32 %v814, %v754
    %v823 = vmul.f32 %v813, %v757
    %v824 = vmul.f32 %v814, %v760
    %v825 = vmul.f32 %v813, %v763
    %v826 = vmul.f32 %v814, %v766
    %v827 = vmul.f32 %v813, %v769
    %v828 = vmul.f32 %v814, %v772
    %v829 = vmul.f32 %v813, %v775
    %v830 = vmul.f32 %v814, %v778
    %v831 = vmul.f32 %v813, %v781
    %v832 = vmul.f32 %v814, %v784
    %v833 = vmul.f32 %v813, %v787
    %v834 = vmul.f32 %v814, %v790
    %v835 = vmul.f32 %v813, %v793
    %v836 = vmul.f32 %v814, %v796
    %v837 = vadd.f32 %v821, %v817
    %v838 = vadd.f32 %v822, %v818
    %v839 = vadd.f32 %v823, %v817
    %v840 = vadd.f32 %v824, %v818
    %v841 = vadd.f32 %v825, %v817
    %v842 = vadd.f32 %v826, %v818
    %v843 = vadd.f32 %v827, %v817
    %v844 = vadd.f32 %v828, %v818
    %v845 = vadd.f32 %v829, %v817
    %v846 = vadd.f32 %v830, %v818
    %v847 = vadd.f32 %v831, %v817
    %v848 = vadd.f32 %v832, %v818
    %v849 = vadd.f32 %v833, %v817
    %v850 = vadd.f32 %v834, %v818
    %v851 = vadd.f32 %v835, %v817
    %v852 = vadd.f32 %v836, %v818
    %v853 = vmul.f32 %v815, %v797
    %v854 = vmul.f32 %v816, %v798
    %v855 = vmul.f32 %v815, %v799
    %v856 = vmul.f32 %v816, %v800
    %v857 = vmul.f32 %v815, %v801
    %v858 = vmul.f32 %v816, %v802
    %v859 = vmul.f32 %v815, %v803
    %v860 = vmul.f32 %v816, %v804
    %v861 = vmul.f32 %v815, %v805
    %v862 = vmul.f32 %v816, %v806
    %v863 = vmul.f32 %v815, %v807
    %v864 = vmul.f32 %v816, %v808
    %v865 = vmul.f32 %v815, %v809
    %v866 = vmul.f32 %v816, %v810
    %v867 = vmul.f32 %v815, %v811
    %v868 = vmul.f32 %v816, %v812
    %v869 = vadd.f32 %v853, %v819
    %v870 = vadd.f32 %v854, %v820
    %v871 = vadd.f32 %v855, %v819
    %v872 = vadd.f32 %v856, %v820
    %v873 = vadd.f32 %v857, %v819
    %v874 = vadd.f32 %v858, %v820
    %v875 = vadd.f32 %v859, %v819
    %v876 = vadd.f32 %v860, %v820
    %v877 = vadd.f32 %v861, %v819
    %v878 = vadd.f32 %v862, %v820
    %v879 = vadd.f32 %v863, %v819
    %v880 = vadd.f32 %v864, %v820
    %v881 = vadd.f32 %v865, %v819
    %v882 = vadd.f32 %v866, %v820
    %v883 = vadd.f32 %v867, %v819
    %v884 = vadd.f32 %v868, %v820
    %v885 = vmul.f32 %v837, %v869
    %v886 = vmul.f32 %v838, %v870
    %v887 = vmul.f32 %v839, %v871
    %v888 = vmul.f32 %v840, %v872
    %v889 = vmul.f32 %v841, %v873
    %v890 = vmul.f32 %v842, %v874
    %v891 = vmul.f32 %v843, %v875
    %v892 = vmul.f32 %v844, %v876
    %v893 = vmul.f32 %v845, %v877
    %v894 = vmul.f32 %v846, %v878
    %v895 = vmul.f32 %v847, %v879
    %v896 = vmul.f32 %v848, %v880
    %v897 = vmul.f32 %v849, %v881
    %v898 = vmul.f32 %v850, %v882
    %v899 = vmul.f32 %v851, %v883
    %v900 = vmul.f32 %v852, %v884
    %v909 = vrot.slane %v885, 1
    %v910 = vrot.slane %v887, 1
    %v911 = vrot.slane %v889, 1
    %v912 = vrot.slane %v891, 1
    %v913 = vrot.slane %v893, 1
    %v914 = vrot.slane %v895, 1
    %v915 = vrot.slane %v897, 1
    %v916 = vrot.slane %v899, 1
    %v925 = vmul.f32 %v885, %v909
    %v926 = vmul.f32 %v887, %v910
    %v927 = vmul.f32 %v889, %v911
    %v928 = vmul.f32 %v891, %v912
    %v929 = vmul.f32 %v893, %v913
    %v930 = vmul.f32 %v895, %v914
    %v931 = vmul.f32 %v897, %v915
    %v932 = vmul.f32 %v899, %v916
    %v941 = vrot.slane %v886, 1
    %v942 = vrot.slane %v888, 1
    %v943 = vrot.slane %v890, 1
    %v944 = vrot.slane %v892, 1
    %v945 = vrot.slane %v894, 1
    %v946 = vrot.slane %v896, 1
    %v947 = vrot.slane %v898, 1
    %v948 = vrot.slane %v900, 1
    %v957 = vmul.f32 %v886, %v941
    %v958 = vmul.f32 %v888, %v942
    %v959 = vmul.f32 %v890, %v943
    %v960 = vmul.f32 %v892, %v944
    %v961 = vmul.f32 %v894, %v945
    %v962 = vmul.f32 %v896, %v946
    %v963 = vmul.f32 %v898, %v947
    %v964 = vmul.f32 %v900, %v948
    %v973 = vrot.slane %v925, 2
    %v974 = vrot.slane %v926, 2
    %v975 = vrot.slane %v927, 2
    %v976 = vrot.slane %v928, 2
    %v977 = vrot.slane %v929, 2
    %v978 = vrot.slane %v930, 2
    %v979 = vrot.slane %v931, 2
    %v980 = vrot.slane %v932, 2
    %v989 = vmul.f32 %v925, %v973
    %v990 = vmul.f32 %v926, %v974
    %v991 = vmul.f32 %v927, %v975
    %v992 = vmul.f32 %v928, %v976
    %v993 = vmul.f32 %v929, %v977
    %v994 = vmul.f32 %v930, %v978
    %v995 = vmul.f32 %v931, %v979
    %v996 = vmul.f32 %v932, %v980
    %v1005 = vrot.slane %v957, 2
    %v1006 = vrot.slane %v958, 2
    %v1007 = vrot.slane %v959, 2
    %v1008 = vrot.slane %v960, 2
    %v1009 = vrot.slane %v961, 2
    %v1010 = vrot.slane %v962, 2
    %v1011 = vrot.slane %v963, 2
    %v1012 = vrot.slane %v964, 2
    %v1021 = vmul.f32 %v957, %v1005
    %v1022 = vmul.f32 %v958, %v1006
    %v1023 = vmul.f32 %v959, %v1007
    %v1024 = vmul.f32 %v960, %v1008
    %v1025 = vmul.f32 %v961, %v1009
    %v1026 = vmul.f32 %v962, %v1010
    %v1027 = vmul.f32 %v963, %v1011
    %v1028 = vmul.f32 %v964, %v1012
    %v1029 = vrot.slane %v886, 2
    %v1030 = vrot.slane %v888, 2
    %v1031 = vrot.slane %v890, 2
    %v1032 = vrot.slane %v892, 2
    %v1033 = vrot.slane %v894, 2
    %v1034 = vrot.slane %v896, 2
    %v1035 = vrot.slane %v898, 2
    %v1036 = vrot.slane %v900, 2
    %v1045 = vmul.f32 %v957, %v1029
    %v1046 = vmul.f32 %v958, %v1030
    %v1047 = vmul.f32 %v959, %v1031
    %v1048 = vmul.f32 %v960, %v1032
    %v1049 = vmul.f32 %v961, %v1033
    %v1050 = vmul.f32 %v962, %v1034
    %v1051 = vmul.f32 %v963, %v1035
    %v1052 = vmul.f32 %v964, %v1036
    %v1061 = vrot.slane %v989, 4
    %v1062 = vrot.slane %v990, 4
    %v1063 = vrot.slane %v991, 4
    %v1064 = vrot.slane %v992, 4
    %v1065 = vrot.slane %v993, 4
    %v1066 = vrot.slane %v994, 4
    %v1067 = vrot.slane %v995, 4
    %v1068 = vrot.slane %v996, 4
    %v1077 = vmul.f32 %v989, %v1061
    %v1078 = vmul.f32 %v990, %v1062
    %v1079 = vmul.f32 %v991, %v1063
    %v1080 = vmul.f32 %v992, %v1064
    %v1081 = vmul.f32 %v993, %v1065
    %v1082 = vmul.f32 %v994, %v1066
    %v1083 = vmul.f32 %v995, %v1067
    %v1084 = vmul.f32 %v996, %v1068
    %v1093 = vrot.slane %v1045, 4
    %v1094 = vrot.slane %v1046, 4
    %v1095 = vrot.slane %v1047, 4
    %v1096 = vrot.slane %v1048, 4
    %v1097 = vrot.slane %v1049, 4
    %v1098 = vrot.slane %v1050, 4
    %v1099 = vrot.slane %v1051, 4
    %v1100 = vrot.slane %v1052, 4
    %v1109 = vmul.f32 %v1021, %v1093
    %v1110 = vmul.f32 %v1022, %v1094
    %v1111 = vmul.f32 %v1023, %v1095
    %v1112 = vmul.f32 %v1024, %v1096
    %v1113 = vmul.f32 %v1025, %v1097
    %v1114 = vmul.f32 %v1026, %v1098
    %v1115 = vmul.f32 %v1027, %v1099
    %v1116 = vmul.f32 %v1028, %v1100
    %v1117 = vmul.f32 %v1077, %v1109
    %v1118 = vmul.f32 %v1078, %v1110
    %v1119 = vmul.f32 %v1079, %v1111
    %v1120 = vmul.f32 %v1080, %v1112
    %v1121 = vmul.f32 %v1081, %v1113
    %v1122 = vmul.f32 %v1082, %v1114
    %v1123 = vmul.f32 %v1083, %v1115
    %v1124 = vmul.f32 %v1084, %v1116
    %v1133 = vrot.slane %v1118, 7
    %vm1134 = vcmask 1041409
    %v1135 = vsel %vm1134, %v1133, %v1117
    %v1136 = vrot.slane %v1119, 6
    %vm1137 = vcmask 1042434
    %v1138 = vsel %vm1137, %v1136, %v1135
    %v1139 = vrot.slane %v1120, 5
    %vm1140 = vcmask 1043459
    %v1141 = vsel %vm1140, %v1139, %v1138
    %v1142 = vrot.slane %v1121, 4
    %vm1143 = vcmask 1044484
    %v1144 = vsel %vm1143, %v1142, %v1141
    %v1145 = vrot.slane %v1122, 3
    %vm1146 = vcmask 1045509
    %v1147 = vsel %vm1146, %v1145, %v1144
    %v1148 = vrot.slane %v1123, 2
    %vm1149 = vcmask 1046534
    %v1150 = vsel %vm1149, %v1148, %v1147
    %v1151 = vrot.slane %v1124, 1
    %vm1152 = vcmask 1047559
    %v1153 = vsel %vm1152, %v1151, %v1150
    %vm1154 = vcmask 130048
    %v1155 = vsel %vm1154, %v1153, 0
    %v1158 = vsel %vm1154, %v445, 0
    %1160 = vmatprep.subr.mxu0 0.0
    %1161 = vmatpush1.xpose.msra.mxu0 0.0
    %1162 = vmatprep.subr.mxu0 0.0
    %1163 = vmatpush1.xpose.msra.mxu0 0.0
    %1164 = vmatprep.subr.mxu0 0.0
    %1165 = vmatpush1.xpose.msra.mxu0 0.0
    %1166 = vmatprep.subr.mxu0 0.0
    %1167 = vmatpush1.xpose.msra.mxu0 0.0
    %1168 = vmatprep.subr.mxu0 0.0
    %1169 = vmatpush1.xpose.msra.mxu0 0.0
    %1170 = vmatprep.subr.mxu0 0.0
    %1171 = vmatpush1.xpose.msra.mxu0 0.0
    %1172 = vmatprep.subr.mxu0 0.0
    %1173 = vmatpush1.xpose.msra.mxu0 0.0
    %1174 = vmatprep.subr.mxu0 0.0
    %1175 = vmatpush1.xpose.msra.mxu0 0.0
    %1176 = vmatprep.subr.mxu0 0.0
    %1177 = vmatpush1.xpose.msra.mxu0 0.0
    %1178 = vmatprep.subr.mxu0 0.0
    %1179 = vmatpush1.xpose.msra.mxu0 0.0
    %1180 = vmatprep.subr.mxu0 0.0
    %1181 = vmatpush1.xpose.msra.mxu0 0.0
    %1182 = vmatprep.subr.mxu0 0.0
    %1183 = vmatpush1.xpose.msra.mxu0 0.0
    %1184 = vmatprep.subr.mxu0 0.0
    %1185 = vmatpush1.xpose.msra.mxu0 0.0
    %1186 = vmatprep.subr.mxu0 0.0
    %1187 = vmatpush1.xpose.msra.mxu0 0.0
    %1188 = vmatprep.subr.mxu0 0.0
    %1189 = vmatpush1.xpose.msra.mxu0 0.0
    %1190 = vmatprep.subr.mxu0 0.0
    %1191 = vmatpush1.xpose.msra.mxu0 %v1158
    %1192 = vmatprep.subr.mxu0 0.0
    %1193 = vmatpush2.xpose.msra.mxu0 0.0
    %1194 = vmatprep.subr.mxu0 0.0
    %1195 = vmatpush2.xpose.msra.mxu0 0.0
    %1196 = vmatprep.subr.mxu0 0.0
    %1197 = vmatpush2.xpose.msra.mxu0 0.0
    %1198 = vmatprep.subr.mxu0 0.0
    %1199 = vmatpush2.xpose.msra.mxu0 0.0
    %1200 = vmatprep.subr.mxu0 0.0
    %1201 = vmatpush2.xpose.msra.mxu0 0.0
    %1202 = vmatprep.subr.mxu0 0.0
    %1203 = vmatpush2.xpose.msra.mxu0 0.0
    %1204 = vmatprep.subr.mxu0 0.0
    %1205 = vmatpush2.xpose.msra.mxu0 0.0
    %1206 = vmatprep.subr.mxu0 0.0
    %1207 = vmatpush2.xpose.msra.mxu0 0.0
    %1208 = vmatprep.subr.mxu0 0.0
    %1209 = vmatpush2.xpose.msra.mxu0 0.0
    %1210 = vmatprep.subr.mxu0 0.0
    %1211 = vmatpush2.xpose.msra.mxu0 0.0
    %1212 = vmatprep.subr.mxu0 0.0
    %1213 = vmatpush2.xpose.msra.mxu0 0.0
    %1214 = vmatprep.subr.mxu0 0.0
    %1215 = vmatpush2.xpose.msra.mxu0 0.0
    %1216 = vmatprep.subr.mxu0 0.0
    %1217 = vmatpush2.xpose.msra.mxu0 0.0
    %1218 = vmatprep.subr.mxu0 0.0
    %1219 = vmatpush2.xpose.msra.mxu0 0.0
    %1220 = vmatprep.subr.mxu0 0.0
    %1221 = vmatpush2.xpose.msra.mxu0 0.0
    %1222 = vmatprep.subr.mxu0 0.0
    %1223 = vmatpush2.xpose.msra.mxu0 0.0
    %1224 = vmatprep.mubr.f32.mxu0 0.0
    %1225 = vmatmul.mubr.f32.gmra.mxu0 %v1155
    %v1226 = vpop.f32.mrf.mxu0
    %v1227 = vadd.f32 0.0, %v1226
    %v1228 = vpop.f32.mrf.mxu0
    %1229 = vdwg.mxu0
    %vm1230 = vcmask 31744
    %v1231 = vsel %vm1230, %v1227, -inf
    %1232 = vmax.xlane.f32.xlu0 %v1231
    %v1233 = vpop.xlane.xlu0 %1232
    %v1234 = vsub.f32 %v1227, %v1233
    %v1235 = vmul.f32 %v1234, 1.442695
    %v1236 = vpow.pop %v1235
    %v1237 = vsel %vm1230, %v1236, 0.0
    %1238 = vadd.xlane.f32.xlu0 %v1237
    %v1239 = vpop.xlane.xlu0 %1238
    %v1240 = vlog2.pop %v1239
    %v1241 = vmul.f32 %v1240, 0.6931472
    %v1242 = vsub.f32 %v1234, %v1241
    %1243 = vst.msk [vmem:[%s16] sm:$0xff] %vm1230, %v1242
    %v1244 = vlaneseq
    %v1245 = vand.u32 %v1244, 127
    %vm1246 = vcmp.eq.s32.totalorder %v1245, 0
    %vm1247 = vcmp.eq.s32.totalorder %v1245, 1
    %v1248 = vsel %vm1247, %v493, 0.0
    %v1249 = vsel %vm1246, %v491, %v1248
    %1250 = vst [vmem:[%s17] sm:$0x1] %v1249
    // Predicated region
    $region122: #{_lambda_.1} parent=1 // pred_check
      _
    $region123: #{_lambda_.1} parent=1 // pred_check_branch
      %1252 = sbr.rel (0) target = $region125
    $region124: #{_lambda_.1} parent=1 // pred_region
      _
    $region125: #{_lambda_.1} parent=1 // pred_fallthru
      _
    // Predicated region
    $region126: #{_lambda_.1} parent=1 // pred_check
      _
    $region127: #{_lambda_.1} parent=1 // pred_check_branch
      %1254 = sbr.rel (0) target = $region129
    $region128: #{_lambda_.1} parent=1 // pred_region
      _
    $region129: #{_lambda_.1} parent=1 // pred_fallthru
      _
    // Predicated region
    $region130: #{_lambda_.1} parent=1 // pred_check
      _
    $region131: #{_lambda_.1} parent=1 // pred_check_branch
      %1256 = sbr.rel (0) target = $region133
    $region132: #{_lambda_.1} parent=1 // pred_region
      _
    $region133: #{_lambda_.1} parent=1 // pred_fallthru
      _
    // Predicated region
    $region134: #{_lambda_.1} parent=1 // pred_check
      _
    $region135: #{_lambda_.1} parent=1 // pred_check_branch
      %1258 = sbr.rel (0) target = $region137
    $region136: #{_lambda_.1} parent=1 // pred_region
      _
    $region137: #{_lambda_.1} parent=1 // pred_fallthru
      _
    %1259 = vsyncpa [#allocation4], 1
    %1260 = vsyncpa [#allocation6], 1
    %1261 = vsyncpa [#allocation9], 1
    %1262 = vsyncpa [#allocation12], 1
    %1263 = vsyncpa [#allocation15], 1
    %1264 = vsyncpa [#allocation18], 1
    %1265 = vsyncpa [#allocation21], 1
    %1266 = vsyncpa [#allocation24], 1

</llo_original>
